<compile_context>
chip_gen: v7x
topology: tpu7x:2x2x1
jax: 0.10.0
libtpu: 0.0.40
codegen_flags: <defaults>
</compile_context>

<pallas_src>
import functools

import jax
import jax.numpy as jnp
from jax import lax
from jax.experimental import pallas as pl
from jax.experimental.pallas import tpu as pltpu

_MASK_VALUE = -1e30   # finite "-inf" for masked logits; exp() underflows to exactly 0


def _mha_kernel(x_ref, wqkv_ref, wp_ref, bp_ref, o_ref, *, scale, num_heads, head_size):
    # Block shapes:
    #   x_ref   : (1, T, C)      wqkv_ref : (C, 3*C)   [Wk_all | Wq_all | Wv_all], head-major
    #   wp_ref  : (C, C)         bp_ref   : (1, C)     o_ref : (1, T, C)
    cd = x_ref.dtype                       # MXU operand dtype (bf16 by default)
    x = x_ref[0]                           # (T, C)
    T, C = x.shape

    # --- Fused full-width QKV projection: one (T,C) x (C,3C) GEMM feeds every head. ---
    qkv = jnp.dot(x, wqkv_ref[...], preferred_element_type=jnp.float32)   # (T, 3C) f32
    k_all = qkv[:, 0 * C:1 * C] * scale    # fold embed_dim**-0.5 into k (T,C mul, not T,T)
    q_all = qkv[:, 1 * C:2 * C]
    v_all = qkv[:, 2 * C:3 * C]

    # --- Causal (tril) mask, computed once per grid step (grid-invariant over heads). ---
    row = lax.broadcasted_iota(jnp.int32, (T, T), 0)
    col = lax.broadcasted_iota(jnp.int32, (T, T), 1)
    causal = col <= row                    # row i may attend to columns j <= i

    heads = []
    for h in range(num_heads):             # unrolled; nh is small and static
        sl = slice(h * head_size, (h + 1) * head_size)
        k = k_all[:, sl].astype(cd)        # (T, hs)
        q = q_all[:, sl].astype(cd)
        v = v_all[:, sl].astype(cd)

        # wei = (k * scale) @ q^T   (k on the left, exactly like the module).
        s = lax.dot_general(k, q, (((1,), (1,)), ((), ())),
                            preferred_element_type=jnp.float32)            # (T, T) f32
        s = jnp.where(causal, s, _MASK_VALUE)

        # Softmax with deferred normalization.
        m = jnp.max(s, axis=-1, keepdims=True)
        p = jnp.exp(s - m)                                                  # unnormalized
        l = jnp.sum(p, axis=-1, keepdims=True)
        # TODO(synk): training-mode attention dropout would go here (eval = identity).
        hv = jnp.dot(p.astype(cd), v, preferred_element_type=jnp.float32)  # (T, hs)
        hv = hv * pl.reciprocal(l, approx=True)                            # normalize after p@v
        heads.append(hv)

    # --- Concat (lane-dense (T, C)) + single full-width output projection + bias. ---
    concat = jnp.concatenate(heads, axis=-1)                                # (T, C) f32
    out = jnp.dot(concat.astype(cd), wp_ref[...],
                  preferred_element_type=jnp.float32)                       # (T, C) f32
    out = out + bp_ref[...].astype(jnp.float32)                             # (1,C) broadcast
    # TODO(synk): training-mode output dropout; eval mode = identity.
    o_ref[0] = out.astype(o_ref.dtype)


def multi_head_attention(x, wk, wq, wv, w_proj, b_proj, *,
                         compute_dtype=jnp.bfloat16):
    """Fused multi-head attention forward (eval mode).

    x       : (B, T, C)
    wk/wq/wv: (num_heads, C, hs)  -- per-head nn.Linear(C, hs, bias=False).weight.T, stacked
    w_proj  : (num_heads, hs, C)  -- proj.weight.T ([C, C]) split head-major along the concat dim
    b_proj  : (1, C)              -- proj.bias
    """
    B, T, C = x.shape
    nh, _, hs = wk.shape
    assert nh * hs == C, "concat of heads must equal embed_dim for the projection"
    out_dtype = x.dtype
    scale = float(C) ** -0.5               # module scales by embed_dim**-0.5

    # Pack weights for full-width GEMMs (host/XLA side, done once per call):
    #   W_qkv[:, 0:C]   = [Wk_0 | ... | Wk_{nh-1}]   (head-major columns)
    #   W_qkv[:, C:2C]  = [Wq_0 | ... | Wq_{nh-1}]
    #   W_qkv[:, 2C:3C] = [Wv_0 | ... | Wv_{nh-1}]
    wk_f = jnp.transpose(wk, (1, 0, 2)).reshape(C, C)
    wq_f = jnp.transpose(wq, (1, 0, 2)).reshape(C, C)
    wv_f = jnp.transpose(wv, (1, 0, 2)).reshape(C, C)
    w_qkv = jnp.concatenate([wk_f, wq_f, wv_f], axis=-1)        # (C, 3C)
    wp_f = w_proj.reshape(C, C)                                  # rows head-major -> matches concat

    # bf16 MXU operands with f32 accumulation (peak MXU path, halves weight VMEM).
    xc = x.astype(compute_dtype)
    w_qkv_c = w_qkv.astype(compute_dtype)
    wp_c = wp_f.astype(compute_dtype)
    bp_c = b_proj.astype(jnp.float32)

    itemsize = jnp.dtype(compute_dtype).itemsize
    out_itemsize = jnp.dtype(out_dtype).itemsize

    # VMEM budget: double-buffered blocks + rough f32 intermediate footprint, clamped to
    # [32 MiB, 96 MiB] so it is safe on v5e/v6e (128 MiB) and never exceeds v7x's 64 MiB
    # for the shapes this whole-(T,T) design is meant for.
    block_bytes = (2 * (T * C + 4 * C * C) * itemsize + 2 * C * 4 + 2 * T * C * out_itemsize)
    interm_bytes = 4 * (3 * T * C + 2 * T * T + 3 * T * C)
    vmem_limit = int(max(32 * 2 ** 20, min(96 * 2 ** 20, 2 * (block_bytes + interm_bytes))))

    cost = pl.CostEstimate(
        flops=B * (2 * T * C * 3 * C            # fused QKV projection
                   + nh * 4 * T * T * hs        # scores + p@v per head
                   + 2 * T * C * C),            # output projection
        transcendentals=B * nh * T * (T + 1),   # exp + row reciprocals
        bytes_accessed=(B * T * C * itemsize            # x
                        + 4 * C * C * itemsize          # W_qkv + W_proj (fetched once)
                        + C * 4                         # bias (f32)
                        + B * T * C * out_itemsize))    # output

    return pl.pallas_call(
        functools.partial(_mha_kernel, scale=scale, num_heads=nh, head_size=hs),
        out_shape=jax.ShapeDtypeStruct((B, T, C), out_dtype),
        grid_spec=pltpu.PrefetchScalarGridSpec(
            num_scalar_prefetch=0,
            grid=(B,),                                           # batch only; heads in-body
            in_specs=[
                pl.BlockSpec((1, T, C), lambda b: (b, 0, 0)),    # x (whole sequence)
                pl.BlockSpec((C, 3 * C), lambda b: (0, 0)),      # fused QKV weights (resident)
                pl.BlockSpec((C, C), lambda b: (0, 0)),          # output projection (resident)
                pl.BlockSpec((1, C), lambda b: (0, 0)),          # proj bias
            ],
            out_specs=pl.BlockSpec((1, T, C), lambda b: (b, 0, 0)),
        ),
        compiler_params=pltpu.CompilerParams(
            dimension_semantics=("parallel",),                   # no cross-step state -> safe
            vmem_limit_bytes=vmem_limit),
        cost_estimate=cost,
    )(xc, w_qkv_c, wp_c, bp_c)


def _reference(x, wk, wq, wv, w_proj, b_proj, *, mirror_dtype=None):
    """Pure-JAX reference of the PyTorch forward (eval mode).

    If mirror_dtype is set, operands are rounded through that dtype before each matmul,
    mirroring the kernel's bf16-operand / f32-accumulate recipe (including the scale
    folded into k before the score matmul) so the numeric comparison is tight.
    """
    f32 = jnp.float32
    cast = ((lambda a: a.astype(mirror_dtype).astype(f32))
            if mirror_dtype is not None else (lambda a: a.astype(f32)))
    hp = jax.lax.Precision.HIGHEST
    B, T, C = x.shape
    scale = float(C) ** -0.5
    xk = cast(x)
    k = jnp.einsum('btc,hcs->bhts', xk, cast(wk), precision=hp)
    q = jnp.einsum('btc,hcs->bhts', xk, cast(wq), precision=hp)
    v = jnp.einsum('btc,hcs->bhts', xk, cast(wv), precision=hp)
    s = jnp.einsum('bhts,bhus->bhtu', cast(k * scale), cast(q), precision=hp)
    mask = jnp.tril(jnp.ones((T, T), dtype=bool))
    s = jnp.where(mask[None, None], s, _MASK_VALUE)
    m = jnp.max(s, axis=-1, keepdims=True)
    p = jnp.exp(s - m)
    l = jnp.sum(p, axis=-1, keepdims=True)
    head = jnp.einsum('bhtu,bhus->bhts', cast(p), cast(v), precision=hp) / l
    out = jnp.einsum('bhts,hsc->btc', cast(head), cast(w_proj), precision=hp)
    return out + b_proj.astype(f32)


if __name__ == "__main__":
    # Small shapes consistent with the module (embed split evenly over heads),
    # kept lane-dense: last dims are multiples of 128.
    B, T, C, NUM_HEADS = 2, 128, 128, 4
    HS = C // NUM_HEADS

    key = jax.random.PRNGKey(0)
    kx, k1, k2, k3, k4, k5 = jax.random.split(key, 6)
    x = jax.random.normal(kx, (B, T, C), dtype=jnp.float32)
    # Per-head weights stored [in, out] (= torch weight.T), stacked over heads.
    wk = jax.random.normal(k1, (NUM_HEADS, C, HS), jnp.float32) / jnp.sqrt(C)
    wq = jax.random.normal(k2, (NUM_HEADS, C, HS), jnp.float32) / jnp.sqrt(C)
    wv = jax.random.normal(k3, (NUM_HEADS, C, HS), jnp.float32) / jnp.sqrt(C)
    # proj.weight.T ([C, C]) split head-major along the concat axis; proj has bias.
    w_proj = jax.random.normal(k4, (NUM_HEADS, HS, C), jnp.float32) / jnp.sqrt(C)
    b_proj = jax.random.normal(k5, (1, C), jnp.float32) * 0.01

    y = multi_head_attention(x, wk, wq, wv, w_proj, b_proj)
    jax.block_until_ready(y)

    # Tight check against a reference mirroring the kernel's bf16/f32 recipe.
    y_mirror = _reference(x, wk, wq, wv, w_proj, b_proj, mirror_dtype=jnp.bfloat16)
    assert jnp.allclose(y, y_mirror, atol=1e-2, rtol=1e-2), "mismatch vs mirrored reference"
    # Loose check against full-f32 module semantics (only bf16 operand rounding differs).
    y_f32 = _reference(x, wk, wq, wv, w_proj, b_proj)
    assert jnp.allclose(y, y_f32, atol=1e-1, rtol=1e-1), "mismatch vs f32 reference"

    print("KERNEL_OK")
</pallas_src>

<mosaic_0001>
module attributes {stable_mosaic.version = 11 : i64} {
  func.func @_mha_kernel(%arg0: i32, %arg1: memref<1x128x128xbf16, #tpu.memory_space<vmem>>, %arg2: memref<128x384xbf16, #tpu.memory_space<vmem>>, %arg3: memref<128x128xbf16, #tpu.memory_space<vmem>>, %arg4: memref<1x128xf32, #tpu.memory_space<vmem>>, %arg5: memref<1x128x128xf32, #tpu.memory_space<vmem>>) attributes {dimension_semantics = [#tpu.dimension_semantics<parallel>], iteration_bounds = array<i64: 2>, scalar_prefetch = 0 : i64, scratch_operands = 0 : i64, tpu.core_type = #tpu.core_type<tc>, window_params = [{transform_indices = @transform_0, window_bounds = array<i64: 1, 128, 128>}, {pipeline_mode = #tpu.pipeline_mode<synchronous>, transform_indices = @transform_1, window_bounds = array<i64: 128, 384>}, {pipeline_mode = #tpu.pipeline_mode<synchronous>, transform_indices = @transform_2, window_bounds = array<i64: 128, 128>}, {pipeline_mode = #tpu.pipeline_mode<synchronous>, transform_indices = @transform_3, window_bounds = array<i64: 1, 128>}, {transform_indices = @transform_4, window_bounds = array<i64: 1, 128, 128>}]} {
    %c0 = arith.constant 0 : index
    %c0_0 = arith.constant 0 : index
    %c0_1 = arith.constant 0 : index
    %0 = vector.load %arg1[%c0, %c0_0, %c0_1] : memref<1x128x128xbf16, #tpu.memory_space<vmem>>, vector<1x128x128xbf16>
    %1 = vector.shape_cast %0 : vector<1x128x128xbf16> to vector<128x128xbf16>
    %c0_2 = arith.constant 0 : index
    %c0_3 = arith.constant 0 : index
    %2 = vector.load %arg2[%c0_2, %c0_3] : memref<128x384xbf16, #tpu.memory_space<vmem>>, vector<128x384xbf16>
    %cst = arith.constant dense<0.000000e+00> : vector<128x384xf32>
    %3 = tpu.matmul %1, %2, %cst {dimension_numbers = #tpu.dot_dimension_numbers<[1], [0], [0], [1], [0, 0, 1, 1], [], []>} : vector<128x128xbf16>, vector<128x384xbf16>, vector<128x384xf32> -> vector<128x384xf32>
    %4 = vector.extract_strided_slice %3 {offsets = [0, 0], sizes = [128, 128], strides = [1, 1]} : vector<128x384xf32> to vector<128x128xf32>
    %cst_4 = arith.constant 0.0883883461 : f32
    %5 = vector.broadcast %cst_4 : f32 to vector<128x128xf32>
    %6 = arith.mulf %4, %5 : vector<128x128xf32>
    %7 = vector.extract_strided_slice %3 {offsets = [0, 128], sizes = [128, 128], strides = [1, 1]} : vector<128x384xf32> to vector<128x128xf32>
    %8 = vector.extract_strided_slice %3 {offsets = [0, 256], sizes = [128, 128], strides = [1, 1]} : vector<128x384xf32> to vector<128x128xf32>
    %9 = tpu.iota {dimensions = array<i32: 0>} : vector<128x128xi32>
    %10 = tpu.iota {dimensions = array<i32: 1>} : vector<128x128xi32>
    %11 = arith.cmpi sle, %10, %9 : vector<128x128xi32>
    %12 = vector.extract_strided_slice %6 {offsets = [0, 0], sizes = [128, 32], strides = [1, 1]} : vector<128x128xf32> to vector<128x32xf32>
    %13 = arith.truncf %12 : vector<128x32xf32> to vector<128x32xbf16>
    %14 = vector.extract_strided_slice %7 {offsets = [0, 0], sizes = [128, 32], strides = [1, 1]} : vector<128x128xf32> to vector<128x32xf32>
    %15 = arith.truncf %14 : vector<128x32xf32> to vector<128x32xbf16>
    %16 = vector.extract_strided_slice %8 {offsets = [0, 0], sizes = [128, 32], strides = [1, 1]} : vector<128x128xf32> to vector<128x32xf32>
    %17 = arith.truncf %16 : vector<128x32xf32> to vector<128x32xbf16>
    %cst_5 = arith.constant dense<0.000000e+00> : vector<128x128xf32>
    %18 = tpu.matmul %13, %15, %cst_5 {dimension_numbers = #tpu.dot_dimension_numbers<[1], [1], [0], [0], [0, 0, 1, 0], [], []>} : vector<128x32xbf16>, vector<128x32xbf16>, vector<128x128xf32> -> vector<128x128xf32>
    %cst_6 = arith.constant -1.000000e+30 : f32
    %19 = vector.broadcast %cst_6 : f32 to vector<128x128xf32>
    %20 = arith.select %11, %18, %19 : vector<128x128xi1>, vector<128x128xf32>
    %cst_7 = arith.constant dense<0xFF800000> : vector<128xf32>
    %21 = vector.multi_reduction <maximumf>, %20, %cst_7 [1] : vector<128x128xf32> to vector<128xf32>
    %22 = vector.shape_cast %21 : vector<128xf32> to vector<128x1xf32>
    %23 = vector.broadcast %22 : vector<128x1xf32> to vector<128x128xf32>
    %24 = arith.subf %20, %23 : vector<128x128xf32>
    %25 = math.exp %24 : vector<128x128xf32>
    %cst_8 = arith.constant dense<0.000000e+00> : vector<128xf32>
    %26 = vector.multi_reduction <add>, %25, %cst_8 [1] : vector<128x128xf32> to vector<128xf32>
    %27 = vector.shape_cast %26 : vector<128xf32> to vector<128x1xf32>
    %28 = arith.truncf %25 : vector<128x128xf32> to vector<128x128xbf16>
    %cst_9 = arith.constant dense<0.000000e+00> : vector<128x32xf32>
    %29 = tpu.matmul %28, %17, %cst_9 {dimension_numbers = #tpu.dot_dimension_numbers<[1], [0], [0], [1], [0, 0, 1, 1], [], []>} : vector<128x128xbf16>, vector<128x32xbf16>, vector<128x32xf32> -> vector<128x32xf32>
    %30 = tpu.reciprocal %27 {approx = true} : vector<128x1xf32> -> vector<128x1xf32>
    %31 = vector.broadcast %30 : vector<128x1xf32> to vector<128x32xf32>
    %32 = arith.mulf %29, %31 : vector<128x32xf32>
    %33 = vector.extract_strided_slice %6 {offsets = [0, 32], sizes = [128, 32], strides = [1, 1]} : vector<128x128xf32> to vector<128x32xf32>
    %34 = arith.truncf %33 : vector<128x32xf32> to vector<128x32xbf16>
    %35 = vector.extract_strided_slice %7 {offsets = [0, 32], sizes = [128, 32], strides = [1, 1]} : vector<128x128xf32> to vector<128x32xf32>
    %36 = arith.truncf %35 : vector<128x32xf32> to vector<128x32xbf16>
    %37 = vector.extract_strided_slice %8 {offsets = [0, 32], sizes = [128, 32], strides = [1, 1]} : vector<128x128xf32> to vector<128x32xf32>
    %38 = arith.truncf %37 : vector<128x32xf32> to vector<128x32xbf16>
    %cst_10 = arith.constant dense<0.000000e+00> : vector<128x128xf32>
    %39 = tpu.matmul %34, %36, %cst_10 {dimension_numbers = #tpu.dot_dimension_numbers<[1], [1], [0], [0], [0, 0, 1, 0], [], []>} : vector<128x32xbf16>, vector<128x32xbf16>, vector<128x128xf32> -> vector<128x128xf32>
    %cst_11 = arith.constant -1.000000e+30 : f32
    %40 = vector.broadcast %cst_11 : f32 to vector<128x128xf32>
    %41 = arith.select %11, %39, %40 : vector<128x128xi1>, vector<128x128xf32>
    %cst_12 = arith.constant dense<0xFF800000> : vector<128xf32>
    %42 = vector.multi_reduction <maximumf>, %41, %cst_12 [1] : vector<128x128xf32> to vector<128xf32>
    %43 = vector.shape_cast %42 : vector<128xf32> to vector<128x1xf32>
    %44 = vector.broadcast %43 : vector<128x1xf32> to vector<128x128xf32>
    %45 = arith.subf %41, %44 : vector<128x128xf32>
    %46 = math.exp %45 : vector<128x128xf32>
    %cst_13 = arith.constant dense<0.000000e+00> : vector<128xf32>
    %47 = vector.multi_reduction <add>, %46, %cst_13 [1] : vector<128x128xf32> to vector<128xf32>
    %48 = vector.shape_cast %47 : vector<128xf32> to vector<128x1xf32>
    %49 = arith.truncf %46 : vector<128x128xf32> to vector<128x128xbf16>
    %cst_14 = arith.constant dense<0.000000e+00> : vector<128x32xf32>
    %50 = tpu.matmul %49, %38, %cst_14 {dimension_numbers = #tpu.dot_dimension_numbers<[1], [0], [0], [1], [0, 0, 1, 1], [], []>} : vector<128x128xbf16>, vector<128x32xbf16>, vector<128x32xf32> -> vector<128x32xf32>
    %51 = tpu.reciprocal %48 {approx = true} : vector<128x1xf32> -> vector<128x1xf32>
    %52 = vector.broadcast %51 : vector<128x1xf32> to vector<128x32xf32>
    %53 = arith.mulf %50, %52 : vector<128x32xf32>
    %54 = vector.extract_strided_slice %6 {offsets = [0, 64], sizes = [128, 32], strides = [1, 1]} : vector<128x128xf32> to vector<128x32xf32>
    %55 = arith.truncf %54 : vector<128x32xf32> to vector<128x32xbf16>
    %56 = vector.extract_strided_slice %7 {offsets = [0, 64], sizes = [128, 32], strides = [1, 1]} : vector<128x128xf32> to vector<128x32xf32>
    %57 = arith.truncf %56 : vector<128x32xf32> to vector<128x32xbf16>
    %58 = vector.extract_strided_slice %8 {offsets = [0, 64], sizes = [128, 32], strides = [1, 1]} : vector<128x128xf32> to vector<128x32xf32>
    %59 = arith.truncf %58 : vector<128x32xf32> to vector<128x32xbf16>
    %cst_15 = arith.constant dense<0.000000e+00> : vector<128x128xf32>
    %60 = tpu.matmul %55, %57, %cst_15 {dimension_numbers = #tpu.dot_dimension_numbers<[1], [1], [0], [0], [0, 0, 1, 0], [], []>} : vector<128x32xbf16>, vector<128x32xbf16>, vector<128x128xf32> -> vector<128x128xf32>
    %cst_16 = arith.constant -1.000000e+30 : f32
    %61 = vector.broadcast %cst_16 : f32 to vector<128x128xf32>
    %62 = arith.select %11, %60, %61 : vector<128x128xi1>, vector<128x128xf32>
    %cst_17 = arith.constant dense<0xFF800000> : vector<128xf32>
    %63 = vector.multi_reduction <maximumf>, %62, %cst_17 [1] : vector<128x128xf32> to vector<128xf32>
    %64 = vector.shape_cast %63 : vector<128xf32> to vector<128x1xf32>
    %65 = vector.broadcast %64 : vector<128x1xf32> to vector<128x128xf32>
    %66 = arith.subf %62, %65 : vector<128x128xf32>
    %67 = math.exp %66 : vector<128x128xf32>
    %cst_18 = arith.constant dense<0.000000e+00> : vector<128xf32>
    %68 = vector.multi_reduction <add>, %67, %cst_18 [1] : vector<128x128xf32> to vector<128xf32>
    %69 = vector.shape_cast %68 : vector<128xf32> to vector<128x1xf32>
    %70 = arith.truncf %67 : vector<128x128xf32> to vector<128x128xbf16>
    %cst_19 = arith.constant dense<0.000000e+00> : vector<128x32xf32>
    %71 = tpu.matmul %70, %59, %cst_19 {dimension_numbers = #tpu.dot_dimension_numbers<[1], [0], [0], [1], [0, 0, 1, 1], [], []>} : vector<128x128xbf16>, vector<128x32xbf16>, vector<128x32xf32> -> vector<128x32xf32>
    %72 = tpu.reciprocal %69 {approx = true} : vector<128x1xf32> -> vector<128x1xf32>
    %73 = vector.broadcast %72 : vector<128x1xf32> to vector<128x32xf32>
    %74 = arith.mulf %71, %73 : vector<128x32xf32>
    %75 = vector.extract_strided_slice %6 {offsets = [0, 96], sizes = [128, 32], strides = [1, 1]} : vector<128x128xf32> to vector<128x32xf32>
    %76 = arith.truncf %75 : vector<128x32xf32> to vector<128x32xbf16>
    %77 = vector.extract_strided_slice %7 {offsets = [0, 96], sizes = [128, 32], strides = [1, 1]} : vector<128x128xf32> to vector<128x32xf32>
    %78 = arith.truncf %77 : vector<128x32xf32> to vector<128x32xbf16>
    %79 = vector.extract_strided_slice %8 {offsets = [0, 96], sizes = [128, 32], strides = [1, 1]} : vector<128x128xf32> to vector<128x32xf32>
    %80 = arith.truncf %79 : vector<128x32xf32> to vector<128x32xbf16>
    %cst_20 = arith.constant dense<0.000000e+00> : vector<128x128xf32>
    %81 = tpu.matmul %76, %78, %cst_20 {dimension_numbers = #tpu.dot_dimension_numbers<[1], [1], [0], [0], [0, 0, 1, 0], [], []>} : vector<128x32xbf16>, vector<128x32xbf16>, vector<128x128xf32> -> vector<128x128xf32>
    %cst_21 = arith.constant -1.000000e+30 : f32
    %82 = vector.broadcast %cst_21 : f32 to vector<128x128xf32>
    %83 = arith.select %11, %81, %82 : vector<128x128xi1>, vector<128x128xf32>
    %cst_22 = arith.constant dense<0xFF800000> : vector<128xf32>
    %84 = vector.multi_reduction <maximumf>, %83, %cst_22 [1] : vector<128x128xf32> to vector<128xf32>
    %85 = vector.shape_cast %84 : vector<128xf32> to vector<128x1xf32>
    %86 = vector.broadcast %85 : vector<128x1xf32> to vector<128x128xf32>
    %87 = arith.subf %83, %86 : vector<128x128xf32>
    %88 = math.exp %87 : vector<128x128xf32>
    %cst_23 = arith.constant dense<0.000000e+00> : vector<128xf32>
    %89 = vector.multi_reduction <add>, %88, %cst_23 [1] : vector<128x128xf32> to vector<128xf32>
    %90 = vector.shape_cast %89 : vector<128xf32> to vector<128x1xf32>
    %91 = arith.truncf %88 : vector<128x128xf32> to vector<128x128xbf16>
    %cst_24 = arith.constant dense<0.000000e+00> : vector<128x32xf32>
    %92 = tpu.matmul %91, %80, %cst_24 {dimension_numbers = #tpu.dot_dimension_numbers<[1], [0], [0], [1], [0, 0, 1, 1], [], []>} : vector<128x128xbf16>, vector<128x32xbf16>, vector<128x32xf32> -> vector<128x32xf32>
    %93 = tpu.reciprocal %90 {approx = true} : vector<128x1xf32> -> vector<128x1xf32>
    %94 = vector.broadcast %93 : vector<128x1xf32> to vector<128x32xf32>
    %95 = arith.mulf %92, %94 : vector<128x32xf32>
    %96 = tpu.concatenate %32, %53, %74, %95 in 1 : vector<128x32xf32>, vector<128x32xf32>, vector<128x32xf32>, vector<128x32xf32> -> vector<128x128xf32>
    %97 = arith.truncf %96 : vector<128x128xf32> to vector<128x128xbf16>
    %c0_25 = arith.constant 0 : index
    %c0_26 = arith.constant 0 : index
    %98 = vector.load %arg3[%c0_25, %c0_26] : memref<128x128xbf16, #tpu.memory_space<vmem>>, vector<128x128xbf16>
    %cst_27 = arith.constant dense<0.000000e+00> : vector<128x128xf32>
    %99 = tpu.matmul %97, %98, %cst_27 {dimension_numbers = #tpu.dot_dimension_numbers<[1], [0], [0], [1], [0, 0, 1, 1], [], []>} : vector<128x128xbf16>, vector<128x128xbf16>, vector<128x128xf32> -> vector<128x128xf32>
    %c0_28 = arith.constant 0 : index
    %c0_29 = arith.constant 0 : index
    %100 = vector.load %arg4[%c0_28, %c0_29] : memref<1x128xf32, #tpu.memory_space<vmem>>, vector<1x128xf32>
    %101 = vector.broadcast %100 : vector<1x128xf32> to vector<128x128xf32>
    %102 = arith.addf %99, %101 : vector<128x128xf32>
    %c0_30 = arith.constant 0 : index
    %c0_31 = arith.constant 0 : index
    %c0_32 = arith.constant 0 : index
    %103 = vector.load %arg5[%c0_30, %c0_31, %c0_32] : memref<1x128x128xf32, #tpu.memory_space<vmem>>, vector<1x128x128xf32>
    %104 = vector.shape_cast %103 : vector<1x128x128xf32> to vector<128x128xf32>
    %105 = vector.shape_cast %102 : vector<128x128xf32> to vector<1x128x128xf32>
    tpu.vector_store %arg5[%c0_30, %c0_31, %c0_32], %105 {strides = array<i32>} : memref<1x128x128xf32, #tpu.memory_space<vmem>>, vector<1x128x128xf32>,
    return
  }
  func.func @transform_0(%arg0: i32) -> (i32, i32, i32) {
    %c0_i32 = arith.constant 0 : i32
    %c0_i32_0 = arith.constant 0 : i32
    %c0_i32_1 = arith.constant 0 : i32
    return %arg0, %c0_i32, %c0_i32_0 : i32, i32, i32
  }
  func.func @transform_1(%arg0: i32) -> (i32, i32) {
    %c0_i32 = arith.constant 0 : i32
    %c0_i32_0 = arith.constant 0 : i32
    %c0_i32_1 = arith.constant 0 : i32
    return %c0_i32, %c0_i32_0 : i32, i32
  }
  func.func @transform_2(%arg0: i32) -> (i32, i32) {
    %c0_i32 = arith.constant 0 : i32
    %c0_i32_0 = arith.constant 0 : i32
    %c0_i32_1 = arith.constant 0 : i32
    return %c0_i32, %c0_i32_0 : i32, i32
  }
  func.func @transform_3(%arg0: i32) -> (i32, i32) {
    %c0_i32 = arith.constant 0 : i32
    %c0_i32_0 = arith.constant 0 : i32
    %c0_i32_1 = arith.constant 0 : i32
    return %c0_i32, %c0_i32_0 : i32, i32
  }
  func.func @transform_4(%arg0: i32) -> (i32, i32, i32) {
    %c0_i32 = arith.constant 0 : i32
    %c0_i32_0 = arith.constant 0 : i32
    %c0_i32_1 = arith.constant 0 : i32
    return %arg0, %c0_i32, %c0_i32_0 : i32, i32, i32
  }
}

</mosaic_0001>

<llo_original>
// kernel: tpu_custom_call.1
$region0: #{tpu_custom_call.1}
  #allocation0 [shape = 'u32[]', space=smem, size = 0x4, offset = 0x4, fixed_abs, tag = 'smem constant byte address 0x4 - core index']
  #allocation1 [shape = 'u32[144,128]{1,0:T(1,128)}', space=vmem, size = 0x12000, scoped, tag = 'internal scratch']
  %s0 = inlined_call_operand.hbm [shape: bf16[2,128,128], index: 0, kind: input, shape index: {}]
  %s1 = inlined_call_operand.hbm [shape: bf16[128,384], index: 1, kind: input, shape index: {}]
  %s2 = inlined_call_operand.hbm [shape: bf16[128,128], index: 2, kind: input, shape index: {}]
  %s3 = inlined_call_operand.vmem [shape: f32[1,128], index: 3, kind: input, shape index: {}]
  %s4 = inlined_call_operand.hbm [shape: f32[2,128,128], index: 4, kind: output, shape index: {}]
  %s5 = sld [smem:[#allocation0]]
  $region61: #{tpu_custom_call.1} parent=0
    _
  %s7 = ssub.s32 1, %s5
  %s8 = scalar_select 0, %s7, %s5
  $region1: #{tpu_custom_call.1} parent=0
    #allocation2 [shape = 'u8[65536]{0}', space=vmem, size = 0x10000, scoped, tag = 'input window, operand 0']
    #allocation3 [shape = 's32[2]{0}', space=sflag, size = 0x8, scoped, tag = 'scoped memory for tpu_custom_call.1']
    #allocation4 [shape = 's32[2]{0}', space=sflag, size = 0x8, scoped, tag = 'scoped memory for tpu_custom_call.1']
    #allocation5 [shape = 'u8[98304]{0}', space=vmem, size = 0x18000, scoped, tag = 'input window, operand 1, single buffered']
    #allocation6 [shape = 's32[1]{0}', space=sflag, size = 0x4, scoped, tag = 'scoped memory for tpu_custom_call.1']
    #allocation7 [shape = 'u8[32768]{0}', space=vmem, size = 0x8000, scoped, tag = 'input window, operand 2, single buffered']
    #allocation8 [shape = 'u8[131072]{0}', space=vmem, size = 0x20000, scoped, tag = 'output window, operand 0']
    %9 = vsyncpa [#allocation3], 0
    %s10 = scalar_lea.sflag [#allocation3], 1
    %11 = vsyncpa %s10, 0
    %12 = vsyncpa [#allocation6], 0
    %13 = vsyncpa [#allocation4], 0
    %s14 = scalar_lea.sflag [#allocation4], 1
    %15 = vsyncpa %s14, 0
    loop: start=0, step=1, limit=4
    $region2: #{tpu_custom_call.1} parent=1 // loop_pre_header
      _
    $region3: #{tpu_custom_call.1} parent=1 // loop_header
      %s17 = sphi 0, %s21
      %p18 = scmp.ge.s32.totalorder %s17, 4
      %s27 = sphi 0, %s29
      %s30 = sphi 0, %s27
      %s31 = sphi 0, %s30
      %s47 = sphi 0, %s31
      %s51 = sphi 0, %s51
      %s53 = sphi 0, %s51
      %s54 = sphi 0, %s53
      %s68 = sphi 0, %s54
      %s72 = sphi 0, %s72
      %s74 = sphi 0, %s72
      %s75 = sphi 0, %s74
      %s89 = sphi 0, %s75
      %s93 = sphi 0, %s93
      %s95 = sphi 0, %s93
      %s96 = sphi 0, %s95
      %s110 = sphi 0, %s96
      %s116 = sphi 0, %s118
      %s119 = sphi 0, %s116
      %s120 = sphi 0, %s119
      %s136 = sphi 0, %s120
    $region4: #{tpu_custom_call.1} parent=1 // loop_header_branch
      %20 = sbr.rel (%p18) target = $region8
    $region5: #{tpu_custom_call.1} parent=1 // loop_body
      %s22 = ssub.s32 %s17, 1
      %s23 = ssub.s32 %s17, 2
      %s24 = sadd.s32 %s17, 1
      %s25 = ssub.s32 %s17, %s24
      %p26 = scmp.eq.s32.totalorder %s25, 0
      %s28 = sadd.s32 %s27, 1
      %s29 = scalar_select %p26, %s27, %s28
      %p32 = pneg %p26
      %p33 = scmp.eq.s32.totalorder %s17, 1
      %p34 = por %p32, %p33
      %p35 = scmp.ne.s32.totalorder %s27, %s30
      %p36 = scmp.eq.s32.totalorder %s17, 0
      %p37 = por %p35, %p36
      %p38 = scmp.ne.s32.totalorder %s27, %s30
      %p39 = scmp.eq.s32.totalorder %s22, 1
      %p40 = por %p38, %p39
      %p41 = scmp.ne.s32.totalorder %s30, %s31
      %p42 = scmp.eq.s32.totalorder %s22, 0
      %p43 = por %p41, %p42
      %p44 = scmp.ne.s32.totalorder %s30, %s31
      %p45 = scmp.eq.s32.totalorder %s23, 1
      %p46 = por %p44, %p45
      %p48 = scmp.ne.s32.totalorder %s31, %s47
      %p49 = scmp.eq.s32.totalorder %s23, 0
      %p50 = por %p48, %p49
      %s52 = sadd.s32 %s51, 1
      %p55 = scmp.eq.s32.totalorder %s17, 1
      %p56 = scmp.ne.s32.totalorder %s51, %s53
      %p57 = scmp.eq.s32.totalorder %s17, 0
      %p58 = por %p56, %p57
      %p59 = scmp.ne.s32.totalorder %s51, %s53
      %p60 = scmp.eq.s32.totalorder %s22, 1
      %p61 = por %p59, %p60
      %p62 = scmp.ne.s32.totalorder %s53, %s54
      %p63 = scmp.eq.s32.totalorder %s22, 0
      %p64 = por %p62, %p63
      %p65 = scmp.ne.s32.totalorder %s53, %s54
      %p66 = scmp.eq.s32.totalorder %s23, 1
      %p67 = por %p65, %p66
      %p69 = scmp.ne.s32.totalorder %s54, %s68
      %p70 = scmp.eq.s32.totalorder %s23, 0
      %p71 = por %p69, %p70
      %s73 = sadd.s32 %s72, 1
      %p76 = scmp.eq.s32.totalorder %s17, 1
      %p77 = scmp.ne.s32.totalorder %s72, %s74
      %p78 = scmp.eq.s32.totalorder %s17, 0
      %p79 = por %p77, %p78
      %p80 = scmp.ne.s32.totalorder %s72, %s74
      %p81 = scmp.eq.s32.totalorder %s22, 1
      %p82 = por %p80, %p81
      %p83 = scmp.ne.s32.totalorder %s74, %s75
      %p84 = scmp.eq.s32.totalorder %s22, 0
      %p85 = por %p83, %p84
      %p86 = scmp.ne.s32.totalorder %s74, %s75
      %p87 = scmp.eq.s32.totalorder %s23, 1
      %p88 = por %p86, %p87
      %p90 = scmp.ne.s32.totalorder %s75, %s89
      %p91 = scmp.eq.s32.totalorder %s23, 0
      %p92 = por %p90, %p91
      %s94 = sadd.s32 %s93, 1
      %p97 = scmp.eq.s32.totalorder %s17, 1
      %p98 = scmp.ne.s32.totalorder %s93, %s95
      %p99 = scmp.eq.s32.totalorder %s17, 0
      %p100 = por %p98, %p99
      %p101 = scmp.ne.s32.totalorder %s93, %s95
      %p102 = scmp.eq.s32.totalorder %s22, 1
      %p103 = por %p101, %p102
      %p104 = scmp.ne.s32.totalorder %s95, %s96
      %p105 = scmp.eq.s32.totalorder %s22, 0
      %p106 = por %p104, %p105
      %p107 = scmp.ne.s32.totalorder %s95, %s96
      %p108 = scmp.eq.s32.totalorder %s23, 1
      %p109 = por %p107, %p108
      %p111 = scmp.ne.s32.totalorder %s96, %s110
      %p112 = scmp.eq.s32.totalorder %s23, 0
      %p113 = por %p111, %p112
      %s114 = ssub.s32 %s17, %s24
      %p115 = scmp.eq.s32.totalorder %s114, 0
      %s117 = sadd.s32 %s116, 1
      %s118 = scalar_select %p115, %s116, %s117
      %p121 = pneg %p115
      %p122 = scmp.eq.s32.totalorder %s17, 1
      %p123 = por %p121, %p122
      %p124 = scmp.ne.s32.totalorder %s116, %s119
      %p125 = scmp.eq.s32.totalorder %s17, 0
      %p126 = por %p124, %p125
      %p127 = scmp.ne.s32.totalorder %s116, %s119
      %p128 = scmp.eq.s32.totalorder %s22, 1
      %p129 = por %p127, %p128
      %p130 = scmp.ne.s32.totalorder %s119, %s120
      %p131 = scmp.eq.s32.totalorder %s22, 0
      %p132 = por %p130, %p131
      %p133 = scmp.ne.s32.totalorder %s119, %s120
      %p134 = scmp.eq.s32.totalorder %s23, 1
      %p135 = por %p133, %p134
      %p137 = scmp.ne.s32.totalorder %s120, %s136
      %p138 = scmp.eq.s32.totalorder %s23, 0
      %p139 = por %p137, %p138
      %p140 = scmp.le.s32.totalorder 1, %s17
      %p141 = scmp.lt.s32.totalorder %s17, 3
      %p142 = pnand %p140, %p141
      %p143 = pneg %p142
      // Predicated region
      $region9: #{tpu_custom_call.1} parent=5 // pred_check
        _
      $region10: #{tpu_custom_call.1} parent=5 // pred_check_branch
        %145 = sbr.rel (%p142) target = $region12
      $region11: #{tpu_custom_call.1} parent=5 // pred_region
        %s146 = ssub.s32 %s17, 1
        // Predicated region
        $region13: #{tpu_custom_call.1} parent=11 // pred_check
          %p147 = pneg %p64
        $region14: #{tpu_custom_call.1} parent=11 // pred_check_branch
          %149 = sbr.rel (%p147) target = $region16
        $region15: #{tpu_custom_call.1} parent=11 // pred_region
          %s151 = ssub.s32 3072, 3072
          %152 = vsyncadd [#allocation6], %s151
          %s153 = sshll.u32 [#allocation5], 4
          %s154 = int_to_ptr.vmem [resolvable:$true] %s153
          %159 = dma.hbm_to_vmem [thread:$0]  %s1, 3072, %s154, [#allocation6], 192, 192, 12
        $region16: #{tpu_custom_call.1} parent=11 // pred_fallthru
          _
        // Predicated region
        $region17: #{tpu_custom_call.1} parent=11 // pred_check
          %p160 = pneg %p85
        $region18: #{tpu_custom_call.1} parent=11 // pred_check_branch
          %162 = sbr.rel (%p160) target = $region20
        $region19: #{tpu_custom_call.1} parent=11 // pred_region
          %s164 = ssub.s32 1024, 1024
          %165 = vsyncadd [#allocation6], %s164
          %s166 = sshll.u32 [#allocation7], 4
          %s167 = int_to_ptr.vmem [resolvable:$true] %s166
          %172 = dma.hbm_to_vmem [thread:$0]  %s2, 1024, %s167, [#allocation6], 64, 64, 4
        $region20: #{tpu_custom_call.1} parent=11 // pred_fallthru
          _
        // Predicated region
        $region21: #{tpu_custom_call.1} parent=11 // pred_check
          %p173 = pneg %p106
        $region22: #{tpu_custom_call.1} parent=11 // pred_check_branch
          %175 = sbr.rel (%p173) target = $region24
        $region23: #{tpu_custom_call.1} parent=11 // pred_region
          _
        $region24: #{tpu_custom_call.1} parent=11 // pred_fallthru
          _
      $region12: #{tpu_custom_call.1} parent=5 // pred_fallthru
        _
      %p176 = scmp.lt.s32.totalorder %s17, 2
      // Predicated region
      $region25: #{tpu_custom_call.1} parent=5 // pred_check
        %p177 = pneg %p176
      $region26: #{tpu_custom_call.1} parent=5 // pred_check_branch
        %179 = sbr.rel (%p177) target = $region28
      $region27: #{tpu_custom_call.1} parent=5 // pred_region
        // Predicated region
        $region29: #{tpu_custom_call.1} parent=27 // pred_check
          %p180 = pneg %p37
        $region30: #{tpu_custom_call.1} parent=27 // pred_check_branch
          %182 = sbr.rel (%p180) target = $region32
        $region31: #{tpu_custom_call.1} parent=27 // pred_region
          %s183 = sand.u32 %s27, 1
          %s184 = scalar_lea.sflag [#allocation3], %s183
          %s185 = sand.u32 %s27, 1
          %s186 = smul.addr %s185, 64
          %s187 = scalar_lea.vmem [#allocation2], %s186
          %s189 = ssub.s32 1024, 1024
          %190 = vsyncadd %s184, %s189
          %s191 = smul.addr %s17, 16
          %s192 = smul.addr %s191, 64
          %s193 = scalar_lea.hbm %s0, %s192
          %s194 = sshll.u32 %s187, 4
          %s195 = int_to_ptr.vmem [resolvable:$true] %s194
          %200 = dma.hbm_to_vmem [thread:$0]  %s193, 1024, %s195, %s184, 64, 64, 4
        $region32: #{tpu_custom_call.1} parent=27 // pred_fallthru
          _
      $region28: #{tpu_custom_call.1} parent=5 // pred_fallthru
        _
      %p201 = scmp.le.s32.totalorder 1, %s17
      %p202 = scmp.lt.s32.totalorder %s17, 3
      %p203 = pnand %p201, %p202
      %p204 = pneg %p203
      // Predicated region
      $region33: #{tpu_custom_call.1} parent=5 // pred_check
        _
      $region34: #{tpu_custom_call.1} parent=5 // pred_check_branch
        %206 = sbr.rel (%p203) target = $region36
      $region35: #{tpu_custom_call.1} parent=5 // pred_region
        %s207 = ssub.s32 %s17, 1
        %s208 = sand.u32 %s30, 1
        %s209 = scalar_lea.sflag [#allocation3], %s208
        %s210 = sand.u32 %s30, 1
        %s211 = smul.addr %s210, 64
        %s212 = scalar_lea.vmem [#allocation2], %s211
        // Predicated region
        $region37: #{tpu_custom_call.1} parent=35 // pred_check
          %p213 = pneg %p43
        $region38: #{tpu_custom_call.1} parent=35 // pred_check_branch
          %215 = sbr.rel (%p213) target = $region40
        $region39: #{tpu_custom_call.1} parent=35 // pred_region
          %216 = dma.done %s209, 1024
        $region40: #{tpu_custom_call.1} parent=35 // pred_fallthru
          _
        // Predicated region
        $region41: #{tpu_custom_call.1} parent=35 // pred_check
          %p217 = pneg %p64
        $region42: #{tpu_custom_call.1} parent=35 // pred_check_branch
          %219 = sbr.rel (%p217) target = $region44
        $region43: #{tpu_custom_call.1} parent=35 // pred_region
          %220 = dma.done [#allocation6], 3072
        $region44: #{tpu_custom_call.1} parent=35 // pred_fallthru
          _
        // Predicated region
        $region45: #{tpu_custom_call.1} parent=35 // pred_check
          %p221 = pneg %p85
        $region46: #{tpu_custom_call.1} parent=35 // pred_check_branch
          %223 = sbr.rel (%p221) target = $region48
        $region47: #{tpu_custom_call.1} parent=35 // pred_region
          %224 = dma.done [#allocation6], 1024
        $region48: #{tpu_custom_call.1} parent=35 // pred_fallthru
          _
        %s225 = sand.u32 %s30, 1
        %s226 = scalar_lea.sflag [#allocation3], %s225
        %s227 = sand.u32 %s30, 1
        %s228 = smul.addr %s227, 64
        %s229 = scalar_lea.vmem [#allocation2], %s228
        %p230 = pneg %p43
        %p231 = pneg %p40
        %p232 = pneg %p64
        %p233 = pneg %p61
        %p234 = pneg %p85
        %p235 = pneg %p82
        %p236 = pneg %p106
        %p237 = pneg %p103
        %p238 = pneg %p132
        %p239 = pneg %p129
        %s240 = sand.u32 %s119, 1
        %s241 = scalar_lea.sflag [#allocation4], %s240
        %s242 = sand.u32 %s119, 1
        %s243 = smul.addr %s242, 128
        %s244 = scalar_lea.vmem [#allocation8], %s243
        %v246 = vld [vmem:[%s212] sm:$0xf]
        %v247 = vld [vmem:[%s212 + $0x4] sm:$0xf]
        %v248 = vld [vmem:[%s212 + $0x8] sm:$0xf]
        %v249 = vld [vmem:[%s212 + $0xc] sm:$0xf]
        %v250 = vld [vmem:[%s212 + $0x10] sm:$0xf]
        %v251 = vld [vmem:[%s212 + $0x14] sm:$0xf]
        %v252 = vld [vmem:[%s212 + $0x18] sm:$0xf]
        %v253 = vld [vmem:[%s212 + $0x1c] sm:$0xf]
        %v254 = vld [vmem:[%s212 + $0x20] sm:$0xf]
        %v255 = vld [vmem:[%s212 + $0x24] sm:$0xf]
        %v256 = vld [vmem:[%s212 + $0x28] sm:$0xf]
        %v257 = vld [vmem:[%s212 + $0x2c] sm:$0xf]
        %v258 = vld [vmem:[%s212 + $0x30] sm:$0xf]
        %v259 = vld [vmem:[%s212 + $0x34] sm:$0xf]
        %v260 = vld [vmem:[%s212 + $0x38] sm:$0xf]
        %v261 = vld [vmem:[%s212 + $0x3c] sm:$0xf]
        %v262 = vld [vmem:[#allocation5] sm:$0xff]
        %v263 = vld [vmem:[#allocation5 + $0x8] sm:$0xf]
        %v264 = vld [vmem:[#allocation5 + $0xc] sm:$0xff]
        %v265 = vld [vmem:[#allocation5 + $0x14] sm:$0xf]
        %v266 = vld [vmem:[#allocation5 + $0x18] sm:$0xff]
        %v267 = vld [vmem:[#allocation5 + $0x20] sm:$0xf]
        %v268 = vld [vmem:[#allocation5 + $0x24] sm:$0xff]
        %v269 = vld [vmem:[#allocation5 + $0x2c] sm:$0xf]
        %v270 = vld [vmem:[#allocation5 + $0x30] sm:$0xff]
        %v271 = vld [vmem:[#allocation5 + $0x38] sm:$0xf]
        %v272 = vld [vmem:[#allocation5 + $0x3c] sm:$0xff]
        %v273 = vld [vmem:[#allocation5 + $0x44] sm:$0xf]
        %v274 = vld [vmem:[#allocation5 + $0x48] sm:$0xff]
        %v275 = vld [vmem:[#allocation5 + $0x50] sm:$0xf]
        %v276 = vld [vmem:[#allocation5 + $0x54] sm:$0xff]
        %v277 = vld [vmem:[#allocation5 + $0x5c] sm:$0xf]
        %v278 = vld [vmem:[#allocation5 + $0x60] sm:$0xff]
        %v279 = vld [vmem:[#allocation5 + $0x68] sm:$0xf]
        %v280 = vld [vmem:[#allocation5 + $0x6c] sm:$0xff]
        %v281 = vld [vmem:[#allocation5 + $0x74] sm:$0xf]
        %v282 = vld [vmem:[#allocation5 + $0x78] sm:$0xff]
        %v283 = vld [vmem:[#allocation5 + $0x80] sm:$0xf]
        %v284 = vld [vmem:[#allocation5 + $0x84] sm:$0xff]
        %v285 = vld [vmem:[#allocation5 + $0x8c] sm:$0xf]
        %v286 = vld [vmem:[#allocation5 + $0x90] sm:$0xff]
        %v287 = vld [vmem:[#allocation5 + $0x98] sm:$0xf]
        %v288 = vld [vmem:[#allocation5 + $0x9c] sm:$0xff]
        %v289 = vld [vmem:[#allocation5 + $0xa4] sm:$0xf]
        %v290 = vld [vmem:[#allocation5 + $0xa8] sm:$0xff]
        %v291 = vld [vmem:[#allocation5 + $0xb0] sm:$0xf]
        %v292 = vld [vmem:[#allocation5 + $0xb4] sm:$0xff]
        %v293 = vld [vmem:[#allocation5 + $0xbc] sm:$0xf]
        %v310 = vunpack.c.l.b16 %v246
        %v311 = vunpack.c.l.b16 %v247
        %v312 = vunpack.c.l.b16 %v248
        %v313 = vunpack.c.l.b16 %v249
        %v314 = vunpack.c.l.b16 %v250
        %v315 = vunpack.c.l.b16 %v251
        %v316 = vunpack.c.l.b16 %v252
        %v317 = vunpack.c.l.b16 %v253
        %v318 = vunpack.c.l.b16 %v254
        %v319 = vunpack.c.l.b16 %v255
        %v320 = vunpack.c.l.b16 %v256
        %v321 = vunpack.c.l.b16 %v257
        %v322 = vunpack.c.l.b16 %v258
        %v323 = vunpack.c.l.b16 %v259
        %v324 = vunpack.c.l.b16 %v260
        %v325 = vunpack.c.l.b16 %v261
        %v326 = vpack.c.b16 %v311, %v310
        %v327 = vpack.c.b16 %v313, %v312
        %v328 = vpack.c.b16 %v315, %v314
        %v329 = vpack.c.b16 %v317, %v316
        %v330 = vpack.c.b16 %v319, %v318
        %v331 = vpack.c.b16 %v321, %v320
        %v332 = vpack.c.b16 %v323, %v322
        %v333 = vpack.c.b16 %v325, %v324
        %v374 = vunpack.c.l.b16 %v262
        %v375 = vunpack.c.h.b16 %v262
        %v376 = vunpack.c.l.b16 %v263
        %v377 = vunpack.c.l.b16 %v264
        %v378 = vunpack.c.h.b16 %v264
        %v379 = vunpack.c.l.b16 %v265
        %v380 = vunpack.c.l.b16 %v266
        %v381 = vunpack.c.h.b16 %v266
        %v382 = vunpack.c.l.b16 %v267
        %v383 = vunpack.c.l.b16 %v268
        %v384 = vunpack.c.h.b16 %v268
        %v385 = vunpack.c.l.b16 %v269
        %v386 = vunpack.c.l.b16 %v270
        %v387 = vunpack.c.h.b16 %v270
        %v388 = vunpack.c.l.b16 %v271
        %v389 = vunpack.c.l.b16 %v272
        %v390 = vunpack.c.h.b16 %v272
        %v391 = vunpack.c.l.b16 %v273
        %v392 = vunpack.c.l.b16 %v274
        %v393 = vunpack.c.h.b16 %v274
        %v394 = vunpack.c.l.b16 %v275
        %v395 = vunpack.c.l.b16 %v276
        %v396 = vunpack.c.h.b16 %v276
        %v397 = vunpack.c.l.b16 %v277
        %v398 = vunpack.c.l.b16 %v278
        %v399 = vunpack.c.h.b16 %v278
        %v400 = vunpack.c.l.b16 %v279
        %v401 = vunpack.c.l.b16 %v280
        %v402 = vunpack.c.h.b16 %v280
        %v403 = vunpack.c.l.b16 %v281
        %v404 = vunpack.c.l.b16 %v282
        %v405 = vunpack.c.h.b16 %v282
        %v406 = vunpack.c.l.b16 %v283
        %v407 = vunpack.c.l.b16 %v284
        %v408 = vunpack.c.h.b16 %v284
        %v409 = vunpack.c.l.b16 %v285
        %v410 = vunpack.c.l.b16 %v286
        %v411 = vunpack.c.h.b16 %v286
        %v412 = vunpack.c.l.b16 %v287
        %v413 = vunpack.c.l.b16 %v288
        %v414 = vunpack.c.h.b16 %v288
        %v415 = vunpack.c.l.b16 %v289
        %v416 = vunpack.c.l.b16 %v290
        %v417 = vunpack.c.h.b16 %v290
        %v418 = vunpack.c.l.b16 %v291
        %v419 = vunpack.c.l.b16 %v292
        %v420 = vunpack.c.h.b16 %v292
        %v421 = vunpack.c.l.b16 %v293
        %v422 = vpack.c.b16 %v377, %v374
        %v423 = vpack.c.b16 %v378, %v375
        %v424 = vpack.c.b16 %v379, %v376
        %v425 = vpack.c.b16 %v383, %v380
        %v426 = vpack.c.b16 %v384, %v381
        %v427 = vpack.c.b16 %v385, %v382
        %v428 = vpack.c.b16 %v389, %v386
        %v429 = vpack.c.b16 %v390, %v387
        %v430 = vpack.c.b16 %v391, %v388
        %v431 = vpack.c.b16 %v395, %v392
        %v432 = vpack.c.b16 %v396, %v393
        %v433 = vpack.c.b16 %v397, %v394
        %v434 = vpack.c.b16 %v401, %v398
        %v435 = vpack.c.b16 %v402, %v399
        %v436 = vpack.c.b16 %v403, %v400
        %v437 = vpack.c.b16 %v407, %v404
        %v438 = vpack.c.b16 %v408, %v405
        %v439 = vpack.c.b16 %v409, %v406
        %v440 = vpack.c.b16 %v413, %v410
        %v441 = vpack.c.b16 %v414, %v411
        %v442 = vpack.c.b16 %v415, %v412
        %v443 = vpack.c.b16 %v419, %v416
        %v444 = vpack.c.b16 %v420, %v417
        %v445 = vpack.c.b16 %v421, %v418
        %470 = vmatprep.subr.bf16.mxu0 %v423
        %471 = vmatpush1.bf16.msra.mxu0 %v422
        %472 = vmatprep.subr.bf16.mxu0 %v426
        %473 = vmatpush1.bf16.msra.mxu0 %v425
        %474 = vmatprep.subr.bf16.mxu0 %v429
        %475 = vmatpush1.bf16.msra.mxu0 %v428
        %476 = vmatprep.subr.bf16.mxu0 %v432
        %477 = vmatpush1.bf16.msra.mxu0 %v431
        %478 = vmatprep.subr.bf16.mxu0 %v435
        %479 = vmatpush1.bf16.msra.mxu0 %v434
        %480 = vmatprep.subr.bf16.mxu0 %v438
        %481 = vmatpush1.bf16.msra.mxu0 %v437
        %482 = vmatprep.subr.bf16.mxu0 %v441
        %483 = vmatpush1.bf16.msra.mxu0 %v440
        %484 = vmatprep.subr.bf16.mxu0 %v444
        %485 = vmatpush1.bf16.msra.mxu0 %v443
        %486 = vmatprep.subr.bf16.mxu0 0
        %487 = vmatpush1.bf16.msra.mxu0 0
        %488 = vmatprep.subr.bf16.mxu0 0
        %489 = vmatpush1.bf16.msra.mxu0 0
        %490 = vmatprep.subr.bf16.mxu0 0
        %491 = vmatpush1.bf16.msra.mxu0 0
        %492 = vmatprep.subr.bf16.mxu0 0
        %493 = vmatpush1.bf16.msra.mxu0 0
        %494 = vmatprep.subr.bf16.mxu0 0
        %495 = vmatpush1.bf16.msra.mxu0 0
        %496 = vmatprep.subr.bf16.mxu0 0
        %497 = vmatpush1.bf16.msra.mxu0 0
        %498 = vmatprep.subr.bf16.mxu0 0
        %499 = vmatpush1.bf16.msra.mxu0 0
        %500 = vmatprep.subr.bf16.mxu0 0
        %501 = vmatpush1.bf16.msra.mxu0 0
        %502 = vmatprep.mubr.bf16.mxu0 0
        %503 = vmatmul.mubr.bf16.gmra.mrb[0].mxu0 %v326
        %v504 = vpop.f32.mrb[0].mxu0
        %v505 = vadd.f32 0.0, %v504
        %v506 = vpop.f32.mrb[0].mxu0
        %v507 = vadd.f32 0.0, %v506
        %v508 = vpop.f32.mrb[0].mxu0
        %v509 = vadd.f32 0.0, %v508
        %v510 = vpop.f32.mrb[0].mxu0
        %v511 = vadd.f32 0.0, %v510
        %512 = vmatprep.mubr.bf16.mxu0 0
        %513 = vmatmul.mubr.bf16.gmra.mrb[0].mxu0 %v327
        %v514 = vpop.f32.mrb[0].mxu0
        %v515 = vadd.f32 0.0, %v514
        %v516 = vpop.f32.mrb[0].mxu0
        %v517 = vadd.f32 0.0, %v516
        %v518 = vpop.f32.mrb[0].mxu0
        %v519 = vadd.f32 0.0, %v518
        %v520 = vpop.f32.mrb[0].mxu0
        %v521 = vadd.f32 0.0, %v520
        %522 = vmatprep.mubr.bf16.mxu0 0
        %523 = vmatmul.mubr.bf16.gmra.mrb[0].mxu0 %v328
        %v524 = vpop.f32.mrb[0].mxu0
        %v525 = vadd.f32 0.0, %v524
        %v526 = vpop.f32.mrb[0].mxu0
        %v527 = vadd.f32 0.0, %v526
        %v528 = vpop.f32.mrb[0].mxu0
        %v529 = vadd.f32 0.0, %v528
        %v530 = vpop.f32.mrb[0].mxu0
        %v531 = vadd.f32 0.0, %v530
        %532 = vmatprep.mubr.bf16.mxu0 0
        %533 = vmatmul.mubr.bf16.gmra.mrb[0].mxu0 %v329
        %v534 = vpop.f32.mrb[0].mxu0
        %v535 = vadd.f32 0.0, %v534
        %v536 = vpop.f32.mrb[0].mxu0
        %v537 = vadd.f32 0.0, %v536
        %v538 = vpop.f32.mrb[0].mxu0
        %v539 = vadd.f32 0.0, %v538
        %v540 = vpop.f32.mrb[0].mxu0
        %v541 = vadd.f32 0.0, %v540
        %542 = vmatprep.mubr.bf16.mxu0 0
        %543 = vmatmul.mubr.bf16.gmra.mrb[0].mxu0 %v330
        %v544 = vpop.f32.mrb[0].mxu0
        %v545 = vadd.f32 0.0, %v544
        %v546 = vpop.f32.mrb[0].mxu0
        %v547 = vadd.f32 0.0, %v546
        %v548 = vpop.f32.mrb[0].mxu0
        %v549 = vadd.f32 0.0, %v548
        %v550 = vpop.f32.mrb[0].mxu0
        %v551 = vadd.f32 0.0, %v550
        %552 = vmatprep.mubr.bf16.mxu0 0
        %553 = vmatmul.mubr.bf16.gmra.mrb[0].mxu0 %v331
        %v554 = vpop.f32.mrb[0].mxu0
        %v555 = vadd.f32 0.0, %v554
        %v556 = vpop.f32.mrb[0].mxu0
        %v557 = vadd.f32 0.0, %v556
        %v558 = vpop.f32.mrb[0].mxu0
        %v559 = vadd.f32 0.0, %v558
        %v560 = vpop.f32.mrb[0].mxu0
        %v561 = vadd.f32 0.0, %v560
        %562 = vmatprep.mubr.bf16.mxu0 0
        %563 = vmatmul.mubr.bf16.gmra.mrb[0].mxu0 %v332
        %v564 = vpop.f32.mrb[0].mxu0
        %v565 = vadd.f32 0.0, %v564
        %v566 = vpop.f32.mrb[0].mxu0
        %v567 = vadd.f32 0.0, %v566
        %v568 = vpop.f32.mrb[0].mxu0
        %v569 = vadd.f32 0.0, %v568
        %v570 = vpop.f32.mrb[0].mxu0
        %v571 = vadd.f32 0.0, %v570
        %572 = vmatprep.mubr.bf16.mxu0 0
        %573 = vmatmul.mubr.bf16.gmra.mrb[0].mxu0 %v333
        %v574 = vpop.f32.mrb[0].mxu0
        %v575 = vadd.f32 0.0, %v574
        %v576 = vpop.f32.mrb[0].mxu0
        %v577 = vadd.f32 0.0, %v576
        %v578 = vpop.f32.mrb[0].mxu0
        %v579 = vadd.f32 0.0, %v578
        %v580 = vpop.f32.mrb[0].mxu0
        %v581 = vadd.f32 0.0, %v580
        %582 = vdwg.mxu0
        %583 = vmatprep.subr.bf16.mxu0 0
        %584 = vmatpush1.bf16.msra.mxu0 %v424
        %585 = vmatprep.subr.bf16.mxu0 0
        %586 = vmatpush1.bf16.msra.mxu0 %v427
        %587 = vmatprep.subr.bf16.mxu0 0
        %588 = vmatpush1.bf16.msra.mxu0 %v430
        %589 = vmatprep.subr.bf16.mxu0 0
        %590 = vmatpush1.bf16.msra.mxu0 %v433
        %591 = vmatprep.subr.bf16.mxu0 0
        %592 = vmatpush1.bf16.msra.mxu0 %v436
        %593 = vmatprep.subr.bf16.mxu0 0
        %594 = vmatpush1.bf16.msra.mxu0 %v439
        %595 = vmatprep.subr.bf16.mxu0 0
        %596 = vmatpush1.bf16.msra.mxu0 %v442
        %597 = vmatprep.subr.bf16.mxu0 0
        %598 = vmatpush1.bf16.msra.mxu0 %v445
        %599 = vmatprep.subr.bf16.mxu0 0
        %600 = vmatpush1.bf16.msra.mxu0 0
        %601 = vmatprep.subr.bf16.mxu0 0
        %602 = vmatpush1.bf16.msra.mxu0 0
        %603 = vmatprep.subr.bf16.mxu0 0
        %604 = vmatpush1.bf16.msra.mxu0 0
        %605 = vmatprep.subr.bf16.mxu0 0
        %606 = vmatpush1.bf16.msra.mxu0 0
        %607 = vmatprep.subr.bf16.mxu0 0
        %608 = vmatpush1.bf16.msra.mxu0 0
        %609 = vmatprep.subr.bf16.mxu0 0
        %610 = vmatpush1.bf16.msra.mxu0 0
        %611 = vmatprep.subr.bf16.mxu0 0
        %612 = vmatpush1.bf16.msra.mxu0 0
        %613 = vmatprep.subr.bf16.mxu0 0
        %614 = vmatpush1.bf16.msra.mxu0 0
        %615 = vmatprep.mubr.bf16.mxu0 0
        %616 = vmatmul.mubr.bf16.gmra.mrb[0].mxu0 %v326
        %v617 = vpop.f32.mrb[0].mxu0
        %v618 = vadd.f32 0.0, %v617
        %v619 = vpop.f32.mrb[0].mxu0
        %v620 = vpop.f32.mrb[0].mxu0
        %v621 = vadd.f32 0.0, %v620
        %v622 = vpop.f32.mrb[0].mxu0
        %623 = vmatprep.mubr.bf16.mxu0 0
        %624 = vmatmul.mubr.bf16.gmra.mrb[0].mxu0 %v327
        %v625 = vpop.f32.mrb[0].mxu0
        %v626 = vadd.f32 0.0, %v625
        %v627 = vpop.f32.mrb[0].mxu0
        %v628 = vpop.f32.mrb[0].mxu0
        %v629 = vadd.f32 0.0, %v628
        %v630 = vpop.f32.mrb[0].mxu0
        %631 = vmatprep.mubr.bf16.mxu0 0
        %632 = vmatmul.mubr.bf16.gmra.mrb[0].mxu0 %v328
        %v633 = vpop.f32.mrb[0].mxu0
        %v634 = vadd.f32 0.0, %v633
        %v635 = vpop.f32.mrb[0].mxu0
        %v636 = vpop.f32.mrb[0].mxu0
        %v637 = vadd.f32 0.0, %v636
        %v638 = vpop.f32.mrb[0].mxu0
        %639 = vmatprep.mubr.bf16.mxu0 0
        %640 = vmatmul.mubr.bf16.gmra.mrb[0].mxu0 %v329
        %v641 = vpop.f32.mrb[0].mxu0
        %v642 = vadd.f32 0.0, %v641
        %v643 = vpop.f32.mrb[0].mxu0
        %v644 = vpop.f32.mrb[0].mxu0
        %v645 = vadd.f32 0.0, %v644
        %v646 = vpop.f32.mrb[0].mxu0
        %647 = vmatprep.mubr.bf16.mxu0 0
        %648 = vmatmul.mubr.bf16.gmra.mrb[0].mxu0 %v330
        %v649 = vpop.f32.mrb[0].mxu0
        %v650 = vadd.f32 0.0, %v649
        %v651 = vpop.f32.mrb[0].mxu0
        %v652 = vpop.f32.mrb[0].mxu0
        %v653 = vadd.f32 0.0, %v652
        %v654 = vpop.f32.mrb[0].mxu0
        %655 = vmatprep.mubr.bf16.mxu0 0
        %656 = vmatmul.mubr.bf16.gmra.mrb[0].mxu0 %v331
        %v657 = vpop.f32.mrb[0].mxu0
        %v658 = vadd.f32 0.0, %v657
        %v659 = vpop.f32.mrb[0].mxu0
        %v660 = vpop.f32.mrb[0].mxu0
        %v661 = vadd.f32 0.0, %v660
        %v662 = vpop.f32.mrb[0].mxu0
        %663 = vmatprep.mubr.bf16.mxu0 0
        %664 = vmatmul.mubr.bf16.gmra.mrb[0].mxu0 %v332
        %v665 = vpop.f32.mrb[0].mxu0
        %v666 = vadd.f32 0.0, %v665
        %v667 = vpop.f32.mrb[0].mxu0
        %v668 = vpop.f32.mrb[0].mxu0
        %v669 = vadd.f32 0.0, %v668
        %v670 = vpop.f32.mrb[0].mxu0
        %671 = vmatprep.mubr.bf16.mxu0 0
        %672 = vmatmul.mubr.bf16.gmra.mrb[0].mxu0 %v333
        %v673 = vpop.f32.mrb[0].mxu0
        %v674 = vadd.f32 0.0, %v673
        %v675 = vpop.f32.mrb[0].mxu0
        %v676 = vpop.f32.mrb[0].mxu0
        %v677 = vadd.f32 0.0, %v676
        %v678 = vpop.f32.mrb[0].mxu0
        %679 = vdwg.mxu0
        %v680 = vmul.f32 %v505, 0.088388346
        %v681 = vmul.f32 %v509, 0.088388346
        %v682 = vmul.f32 %v515, 0.088388346
        %v683 = vmul.f32 %v519, 0.088388346
        %v684 = vmul.f32 %v525, 0.088388346
        %v685 = vmul.f32 %v529, 0.088388346
        %v686 = vmul.f32 %v535, 0.088388346
        %v687 = vmul.f32 %v539, 0.088388346
        %v688 = vmul.f32 %v545, 0.088388346
        %v689 = vmul.f32 %v549, 0.088388346
        %v690 = vmul.f32 %v555, 0.088388346
        %v691 = vmul.f32 %v559, 0.088388346
        %v692 = vmul.f32 %v565, 0.088388346
        %v693 = vmul.f32 %v569, 0.088388346
        %v694 = vmul.f32 %v575, 0.088388346
        %v695 = vmul.f32 %v579, 0.088388346
        %v696 = vlaneseq
        %v697 = vshrl.u32 %v696, 7
        %v698 = vadd.s32 %v697, 8
        %v699 = vadd.s32 %v697, 16
        %v700 = vadd.s32 %v697, 24
        %v701 = vadd.s32 %v697, 32
        %v702 = vadd.s32 %v697, 40
        %v703 = vadd.s32 %v697, 48
        %v704 = vadd.s32 %v697, 56
        %v705 = vadd.s32 %v697, 64
        %v706 = vadd.s32 %v697, 72
        %v707 = vadd.s32 %v697, 80
        %v708 = vadd.s32 %v697, 88
        %v709 = vadd.s32 %v697, 96
        %v710 = vadd.s32 %v697, 104
        %v711 = vadd.s32 %v697, 112
        %v712 = vadd.s32 %v697, 120
        %v713 = vlaneseq
        %v714 = vand.u32 %v713, 127
        %vm715 = vcmp.le.s32.totalorder %v714, %v697
        %vm716 = vcmp.le.s32.totalorder %v714, %v698
        %vm717 = vcmp.le.s32.totalorder %v714, %v699
        %vm718 = vcmp.le.s32.totalorder %v714, %v700
        %vm719 = vcmp.le.s32.totalorder %v714, %v701
        %vm720 = vcmp.le.s32.totalorder %v714, %v702
        %vm721 = vcmp.le.s32.totalorder %v714, %v703
        %vm722 = vcmp.le.s32.totalorder %v714, %v704
        %vm723 = vcmp.le.s32.totalorder %v714, %v705
        %vm724 = vcmp.le.s32.totalorder %v714, %v706
        %vm725 = vcmp.le.s32.totalorder %v714, %v707
        %vm726 = vcmp.le.s32.totalorder %v714, %v708
        %vm727 = vcmp.le.s32.totalorder %v714, %v709
        %vm728 = vcmp.le.s32.totalorder %v714, %v710
        %vm729 = vcmp.le.s32.totalorder %v714, %v711
        %vm730 = vcmp.le.s32.totalorder %v714, %v712
        %v731 = vpack.c.bf16 %v681, %v680
        %v732 = vpack.c.bf16 %v683, %v682
        %v733 = vpack.c.bf16 %v685, %v684
        %v734 = vpack.c.bf16 %v687, %v686
        %v735 = vpack.c.bf16 %v689, %v688
        %v736 = vpack.c.bf16 %v691, %v690
        %v737 = vpack.c.bf16 %v693, %v692
        %v738 = vpack.c.bf16 %v695, %v694
        %v739 = vpack.c.bf16 %v511, %v507
        %v740 = vpack.c.bf16 %v521, %v517
        %v741 = vpack.c.bf16 %v531, %v527
        %v742 = vpack.c.bf16 %v541, %v537
        %v743 = vpack.c.bf16 %v551, %v547
        %v744 = vpack.c.bf16 %v561, %v557
        %v745 = vpack.c.bf16 %v571, %v567
        %v746 = vpack.c.bf16 %v581, %v577
        %v747 = vpack.c.bf16 %v621, %v618
        %v748 = vpack.c.bf16 %v629, %v626
        %v749 = vpack.c.bf16 %v637, %v634
        %v750 = vpack.c.bf16 %v645, %v642
        %v751 = vpack.c.bf16 %v653, %v650
        %v752 = vpack.c.bf16 %v661, %v658
        %v753 = vpack.c.bf16 %v669, %v666
        %v754 = vpack.c.bf16 %v677, %v674
        %vm755 = vcmask 261120
        %v757 = vsel %vm755, %v731, 0
        %v760 = vsel %vm755, %v732, 0
        %v763 = vsel %vm755, %v733, 0
        %v766 = vsel %vm755, %v734, 0
        %v769 = vsel %vm755, %v735, 0
        %v772 = vsel %vm755, %v736, 0
        %v775 = vsel %vm755, %v737, 0
        %v778 = vsel %vm755, %v738, 0
        %v781 = vsel %vm755, %v739, 0
        %v784 = vsel %vm755, %v740, 0
        %v787 = vsel %vm755, %v741, 0
        %v790 = vsel %vm755, %v742, 0
        %v793 = vsel %vm755, %v743, 0
        %v796 = vsel %vm755, %v744, 0
        %v799 = vsel %vm755, %v745, 0
        %v802 = vsel %vm755, %v746, 0
        %804 = vmatprep.subr.bf16.mxu0 0
        %805 = vmatpush1.bf16.xpose.msra.mxu0 %v781
        %806 = vmatprep.subr.bf16.mxu0 0
        %807 = vmatpush1.bf16.xpose.msra.mxu0 %v784
        %808 = vmatprep.subr.bf16.mxu0 0
        %809 = vmatpush1.bf16.xpose.msra.mxu0 %v787
        %810 = vmatprep.subr.bf16.mxu0 0
        %811 = vmatpush1.bf16.xpose.msra.mxu0 %v790
        %812 = vmatprep.subr.bf16.mxu0 0
        %813 = vmatpush1.bf16.xpose.msra.mxu0 %v793
        %814 = vmatprep.subr.bf16.mxu0 0
        %815 = vmatpush1.bf16.xpose.msra.mxu0 %v796
        %816 = vmatprep.subr.bf16.mxu0 0
        %817 = vmatpush1.bf16.xpose.msra.mxu0 %v799
        %818 = vmatprep.subr.bf16.mxu0 0
        %819 = vmatpush1.bf16.xpose.msra.mxu0 %v802
        %820 = vmatprep.subr.bf16.mxu0 0
        %821 = vmatpush1.bf16.xpose.msra.mxu0 0
        %822 = vmatprep.subr.bf16.mxu0 0
        %823 = vmatpush1.bf16.xpose.msra.mxu0 0
        %824 = vmatprep.subr.bf16.mxu0 0
        %825 = vmatpush1.bf16.xpose.msra.mxu0 0
        %826 = vmatprep.subr.bf16.mxu0 0
        %827 = vmatpush1.bf16.xpose.msra.mxu0 0
        %828 = vmatprep.subr.bf16.mxu0 0
        %829 = vmatpush1.bf16.xpose.msra.mxu0 0
        %830 = vmatprep.subr.bf16.mxu0 0
        %831 = vmatpush1.bf16.xpose.msra.mxu0 0
        %832 = vmatprep.subr.bf16.mxu0 0
        %833 = vmatpush1.bf16.xpose.msra.mxu0 0
        %834 = vmatprep.subr.bf16.mxu0 0
        %835 = vmatpush1.bf16.xpose.msra.mxu0 0
        %836 = vmatprep.mubr.bf16.mxu0 0
        %837 = vmatmul.mubr.bf16.gmra.mrb[0].mxu0 %v757
        %v838 = vpop.f32.mrb[0].mxu0
        %v839 = vadd.f32 0.0, %v838
        %v840 = vpop.f32.mrb[0].mxu0
        %v841 = vpop.f32.mrb[0].mxu0
        %v842 = vadd.f32 0.0, %v841
        %v843 = vpop.f32.mrb[0].mxu0
        %844 = vmatprep.mubr.bf16.mxu0 0
        %845 = vmatmul.mubr.bf16.gmra.mrb[0].mxu0 %v760
        %v846 = vpop.f32.mrb[0].mxu0
        %v847 = vadd.f32 0.0, %v846
        %v848 = vpop.f32.mrb[0].mxu0
        %v849 = vpop.f32.mrb[0].mxu0
        %v850 = vadd.f32 0.0, %v849
        %v851 = vpop.f32.mrb[0].mxu0
        %852 = vmatprep.mubr.bf16.mxu0 0
        %853 = vmatmul.mubr.bf16.gmra.mrb[0].mxu0 %v763
        %v854 = vpop.f32.mrb[0].mxu0
        %v855 = vadd.f32 0.0, %v854
        %v856 = vpop.f32.mrb[0].mxu0
        %v857 = vpop.f32.mrb[0].mxu0
        %v858 = vadd.f32 0.0, %v857
        %v859 = vpop.f32.mrb[0].mxu0
        %860 = vmatprep.mubr.bf16.mxu0 0
        %861 = vmatmul.mubr.bf16.gmra.mrb[0].mxu0 %v766
        %v862 = vpop.f32.mrb[0].mxu0
        %v863 = vadd.f32 0.0, %v862
        %v864 = vpop.f32.mrb[0].mxu0
        %v865 = vpop.f32.mrb[0].mxu0
        %v866 = vadd.f32 0.0, %v865
        %v867 = vpop.f32.mrb[0].mxu0
        %868 = vmatprep.mubr.bf16.mxu0 0
        %869 = vmatmul.mubr.bf16.gmra.mrb[0].mxu0 %v769
        %v870 = vpop.f32.mrb[0].mxu0
        %v871 = vadd.f32 0.0, %v870
        %v872 = vpop.f32.mrb[0].mxu0
        %v873 = vpop.f32.mrb[0].mxu0
        %v874 = vadd.f32 0.0, %v873
        %v875 = vpop.f32.mrb[0].mxu0
        %876 = vmatprep.mubr.bf16.mxu0 0
        %877 = vmatmul.mubr.bf16.gmra.mrb[0].mxu0 %v772
        %v878 = vpop.f32.mrb[0].mxu0
        %v879 = vadd.f32 0.0, %v878
        %v880 = vpop.f32.mrb[0].mxu0
        %v881 = vpop.f32.mrb[0].mxu0
        %v882 = vadd.f32 0.0, %v881
        %v883 = vpop.f32.mrb[0].mxu0
        %884 = vmatprep.mubr.bf16.mxu0 0
        %885 = vmatmul.mubr.bf16.gmra.mrb[0].mxu0 %v775
        %v886 = vpop.f32.mrb[0].mxu0
        %v887 = vadd.f32 0.0, %v886
        %v888 = vpop.f32.mrb[0].mxu0
        %v889 = vpop.f32.mrb[0].mxu0
        %v890 = vadd.f32 0.0, %v889
        %v891 = vpop.f32.mrb[0].mxu0
        %892 = vmatprep.mubr.bf16.mxu0 0
        %893 = vmatmul.mubr.bf16.gmra.mrb[0].mxu0 %v778
        %v894 = vpop.f32.mrb[0].mxu0
        %v895 = vadd.f32 0.0, %v894
        %v896 = vpop.f32.mrb[0].mxu0
        %v897 = vpop.f32.mrb[0].mxu0
        %v898 = vadd.f32 0.0, %v897
        %v899 = vpop.f32.mrb[0].mxu0
        %900 = vdwg.mxu0
        %v901 = vsel %vm715, %v839, -1e+30
        %v902 = vsel %vm716, %v842, -1e+30
        %v903 = vsel %vm717, %v847, -1e+30
        %v904 = vsel %vm718, %v850, -1e+30
        %v905 = vsel %vm719, %v855, -1e+30
        %v906 = vsel %vm720, %v858, -1e+30
        %v907 = vsel %vm721, %v863, -1e+30
        %v908 = vsel %vm722, %v866, -1e+30
        %v909 = vsel %vm723, %v871, -1e+30
        %v910 = vsel %vm724, %v874, -1e+30
        %v911 = vsel %vm725, %v879, -1e+30
        %v912 = vsel %vm726, %v882, -1e+30
        %v913 = vsel %vm727, %v887, -1e+30
        %v914 = vsel %vm728, %v890, -1e+30
        %v915 = vsel %vm729, %v895, -1e+30
        %v916 = vsel %vm730, %v898, -1e+30
        %917 = vmax.xlane.f32.xlu0 %v901
        %v918 = vpop.xlane.xlu0 %917
        %919 = vmax.xlane.f32.xlu0 %v902
        %v920 = vpop.xlane.xlu0 %919
        %921 = vmax.xlane.f32.xlu0 %v903
        %v922 = vpop.xlane.xlu0 %921
        %923 = vmax.xlane.f32.xlu0 %v904
        %v924 = vpop.xlane.xlu0 %923
        %925 = vmax.xlane.f32.xlu0 %v905
        %v926 = vpop.xlane.xlu0 %925
        %927 = vmax.xlane.f32.xlu0 %v906
        %v928 = vpop.xlane.xlu0 %927
        %929 = vmax.xlane.f32.xlu0 %v907
        %v930 = vpop.xlane.xlu0 %929
        %931 = vmax.xlane.f32.xlu0 %v908
        %v932 = vpop.xlane.xlu0 %931
        %933 = vmax.xlane.f32.xlu0 %v909
        %v934 = vpop.xlane.xlu0 %933
        %935 = vmax.xlane.f32.xlu0 %v910
        %v936 = vpop.xlane.xlu0 %935
        %937 = vmax.xlane.f32.xlu0 %v911
        %v938 = vpop.xlane.xlu0 %937
        %939 = vmax.xlane.f32.xlu0 %v912
        %v940 = vpop.xlane.xlu0 %939
        %941 = vmax.xlane.f32.xlu0 %v913
        %v942 = vpop.xlane.xlu0 %941
        %943 = vmax.xlane.f32.xlu0 %v914
        %v944 = vpop.xlane.xlu0 %943
        %945 = vmax.xlane.f32.xlu0 %v915
        %v946 = vpop.xlane.xlu0 %945
        %947 = vmax.xlane.f32.xlu0 %v916
        %v948 = vpop.xlane.xlu0 %947
        %v949 = vsub.f32 %v901, %v918
        %v950 = vsub.f32 %v902, %v920
        %v951 = vsub.f32 %v903, %v922
        %v952 = vsub.f32 %v904, %v924
        %v953 = vsub.f32 %v905, %v926
        %v954 = vsub.f32 %v906, %v928
        %v955 = vsub.f32 %v907, %v930
        %v956 = vsub.f32 %v908, %v932
        %v957 = vsub.f32 %v909, %v934
        %v958 = vsub.f32 %v910, %v936
        %v959 = vsub.f32 %v911, %v938
        %v960 = vsub.f32 %v912, %v940
        %v961 = vsub.f32 %v913, %v942
        %v962 = vsub.f32 %v914, %v944
        %v963 = vsub.f32 %v915, %v946
        %v964 = vsub.f32 %v916, %v948
        %v965 = vmul.f32 %v949, 1.442695
        %v966 = vpow.pop %v965
        %v967 = vmul.f32 %v950, 1.442695
        %v968 = vpow.pop %v967
        %v969 = vmul.f32 %v951, 1.442695
        %v970 = vpow.pop %v969
        %v971 = vmul.f32 %v952, 1.442695
        %v972 = vpow.pop %v971
        %v973 = vmul.f32 %v953, 1.442695
        %v974 = vpow.pop %v973
        %v975 = vmul.f32 %v954, 1.442695
        %v976 = vpow.pop %v975
        %v977 = vmul.f32 %v955, 1.442695
        %v978 = vpow.pop %v977
        %v979 = vmul.f32 %v956, 1.442695
        %v980 = vpow.pop %v979
        %v981 = vmul.f32 %v957, 1.442695
        %v982 = vpow.pop %v981
        %v983 = vmul.f32 %v958, 1.442695
        %v984 = vpow.pop %v983
        %v985 = vmul.f32 %v959, 1.442695
        %v986 = vpow.pop %v985
        %v987 = vmul.f32 %v960, 1.442695
        %v988 = vpow.pop %v987
        %v989 = vmul.f32 %v961, 1.442695
        %v990 = vpow.pop %v989
        %v991 = vmul.f32 %v962, 1.442695
        %v992 = vpow.pop %v991
        %v993 = vmul.f32 %v963, 1.442695
        %v994 = vpow.pop %v993
        %v995 = vmul.f32 %v964, 1.442695
        %v996 = vpow.pop %v995
        %997 = vadd.xlane.f32.xlu0 %v966
        %v998 = vpop.xlane.xlu0 %997
        %999 = vadd.xlane.f32.xlu0 %v968
        %v1000 = vpop.xlane.xlu0 %999
        %1001 = vadd.xlane.f32.xlu0 %v970
        %v1002 = vpop.xlane.xlu0 %1001
        %1003 = vadd.xlane.f32.xlu0 %v972
        %v1004 = vpop.xlane.xlu0 %1003
        %1005 = vadd.xlane.f32.xlu0 %v974
        %v1006 = vpop.xlane.xlu0 %1005
        %1007 = vadd.xlane.f32.xlu0 %v976
        %v1008 = vpop.xlane.xlu0 %1007
        %1009 = vadd.xlane.f32.xlu0 %v978
        %v1010 = vpop.xlane.xlu0 %1009
        %1011 = vadd.xlane.f32.xlu0 %v980
        %v1012 = vpop.xlane.xlu0 %1011
        %1013 = vadd.xlane.f32.xlu0 %v982
        %v1014 = vpop.xlane.xlu0 %1013
        %1015 = vadd.xlane.f32.xlu0 %v984
        %v1016 = vpop.xlane.xlu0 %1015
        %1017 = vadd.xlane.f32.xlu0 %v986
        %v1018 = vpop.xlane.xlu0 %1017
        %1019 = vadd.xlane.f32.xlu0 %v988
        %v1020 = vpop.xlane.xlu0 %1019
        %1021 = vadd.xlane.f32.xlu0 %v990
        %v1022 = vpop.xlane.xlu0 %1021
        %1023 = vadd.xlane.f32.xlu0 %v992
        %v1024 = vpop.xlane.xlu0 %1023
        %1025 = vadd.xlane.f32.xlu0 %v994
        %v1026 = vpop.xlane.xlu0 %1025
        %1027 = vadd.xlane.f32.xlu0 %v996
        %v1028 = vpop.xlane.xlu0 %1027
        %v1029 = vpack.c.bf16 %v968, %v966
        %v1030 = vpack.c.bf16 %v972, %v970
        %v1031 = vpack.c.bf16 %v976, %v974
        %v1032 = vpack.c.bf16 %v980, %v978
        %v1033 = vpack.c.bf16 %v984, %v982
        %v1034 = vpack.c.bf16 %v988, %v986
        %v1035 = vpack.c.bf16 %v992, %v990
        %v1036 = vpack.c.bf16 %v996, %v994
        %1037 = vmatprep.subr.bf16.mxu0 0
        %1038 = vmatpush1.bf16.msra.mxu0 %v747
        %1039 = vmatprep.subr.bf16.mxu0 0
        %1040 = vmatpush1.bf16.msra.mxu0 %v748
        %1041 = vmatprep.subr.bf16.mxu0 0
        %1042 = vmatpush1.bf16.msra.mxu0 %v749
        %1043 = vmatprep.subr.bf16.mxu0 0
        %1044 = vmatpush1.bf16.msra.mxu0 %v750
        %1045 = vmatprep.subr.bf16.mxu0 0
        %1046 = vmatpush1.bf16.msra.mxu0 %v751
        %1047 = vmatprep.subr.bf16.mxu0 0
        %1048 = vmatpush1.bf16.msra.mxu0 %v752
        %1049 = vmatprep.subr.bf16.mxu0 0
        %1050 = vmatpush1.bf16.msra.mxu0 %v753
        %1051 = vmatprep.subr.bf16.mxu0 0
        %1052 = vmatpush1.bf16.msra.mxu0 %v754
        %1053 = vmatprep.subr.bf16.mxu0 0
        %1054 = vmatpush1.bf16.msra.mxu0 0
        %1055 = vmatprep.subr.bf16.mxu0 0
        %1056 = vmatpush1.bf16.msra.mxu0 0
        %1057 = vmatprep.subr.bf16.mxu0 0
        %1058 = vmatpush1.bf16.msra.mxu0 0
        %1059 = vmatprep.subr.bf16.mxu0 0
        %1060 = vmatpush1.bf16.msra.mxu0 0
        %1061 = vmatprep.subr.bf16.mxu0 0
        %1062 = vmatpush1.bf16.msra.mxu0 0
        %1063 = vmatprep.subr.bf16.mxu0 0
        %1064 = vmatpush1.bf16.msra.mxu0 0
        %1065 = vmatprep.subr.bf16.mxu0 0
        %1066 = vmatpush1.bf16.msra.mxu0 0
        %1067 = vmatprep.subr.bf16.mxu0 0
        %1068 = vmatpush1.bf16.msra.mxu0 0
        %1069 = vmatprep.mubr.bf16.mxu0 0
        %1070 = vmatmul.mubr.bf16.gmra.mrb[0].mxu0 %v1029
        %v1071 = vpop.f32.mrb[0].mxu0
        %v1072 = vadd.f32 0.0, %v1071
        %v1073 = vpop.f32.mrb[0].mxu0
        %v1074 = vpop.f32.mrb[0].mxu0
        %v1075 = vadd.f32 0.0, %v1074
        %v1076 = vpop.f32.mrb[0].mxu0
        %1077 = vmatprep.mubr.bf16.mxu0 0
        %1078 = vmatmul.mubr.bf16.gmra.mrb[0].mxu0 %v1030
        %v1079 = vpop.f32.mrb[0].mxu0
        %v1080 = vadd.f32 0.0, %v1079
        %v1081 = vpop.f32.mrb[0].mxu0
        %v1082 = vpop.f32.mrb[0].mxu0
        %v1083 = vadd.f32 0.0, %v1082
        %v1084 = vpop.f32.mrb[0].mxu0
        %1085 = vmatprep.mubr.bf16.mxu0 0
        %1086 = vmatmul.mubr.bf16.gmra.mrb[0].mxu0 %v1031
        %v1087 = vpop.f32.mrb[0].mxu0
        %v1088 = vadd.f32 0.0, %v1087
        %v1089 = vpop.f32.mrb[0].mxu0
        %v1090 = vpop.f32.mrb[0].mxu0
        %v1091 = vadd.f32 0.0, %v1090
        %v1092 = vpop.f32.mrb[0].mxu0
        %1093 = vmatprep.mubr.bf16.mxu0 0
        %1094 = vmatmul.mubr.bf16.gmra.mrb[0].mxu0 %v1032
        %v1095 = vpop.f32.mrb[0].mxu0
        %v1096 = vadd.f32 0.0, %v1095
        %v1097 = vpop.f32.mrb[0].mxu0
        %v1098 = vpop.f32.mrb[0].mxu0
        %v1099 = vadd.f32 0.0, %v1098
        %v1100 = vpop.f32.mrb[0].mxu0
        %1101 = vmatprep.mubr.bf16.mxu0 0
        %1102 = vmatmul.mubr.bf16.gmra.mrb[0].mxu0 %v1033
        %v1103 = vpop.f32.mrb[0].mxu0
        %v1104 = vadd.f32 0.0, %v1103
        %v1105 = vpop.f32.mrb[0].mxu0
        %v1106 = vpop.f32.mrb[0].mxu0
        %v1107 = vadd.f32 0.0, %v1106
        %v1108 = vpop.f32.mrb[0].mxu0
        %1109 = vmatprep.mubr.bf16.mxu0 0
        %1110 = vmatmul.mubr.bf16.gmra.mrb[0].mxu0 %v1034
        %v1111 = vpop.f32.mrb[0].mxu0
        %v1112 = vadd.f32 0.0, %v1111
        %v1113 = vpop.f32.mrb[0].mxu0
        %v1114 = vpop.f32.mrb[0].mxu0
        %v1115 = vadd.f32 0.0, %v1114
        %v1116 = vpop.f32.mrb[0].mxu0
        %1117 = vmatprep.mubr.bf16.mxu0 0
        %1118 = vmatmul.mubr.bf16.gmra.mrb[0].mxu0 %v1035
        %v1119 = vpop.f32.mrb[0].mxu0
        %v1120 = vadd.f32 0.0, %v1119
        %v1121 = vpop.f32.mrb[0].mxu0
        %v1122 = vpop.f32.mrb[0].mxu0
        %v1123 = vadd.f32 0.0, %v1122
        %v1124 = vpop.f32.mrb[0].mxu0
        %1125 = vmatprep.mubr.bf16.mxu0 0
        %1126 = vmatmul.mubr.bf16.gmra.mrb[0].mxu0 %v1036
        %v1127 = vpop.f32.mrb[0].mxu0
        %v1128 = vadd.f32 0.0, %v1127
        %v1129 = vpop.f32.mrb[0].mxu0
        %v1130 = vpop.f32.mrb[0].mxu0
        %v1131 = vadd.f32 0.0, %v1130
        %v1132 = vpop.f32.mrb[0].mxu0
        %1133 = vdwg.mxu0
        %v1134 = vrcp.pop %v998
        %v1135 = vrcp.pop %v1000
        %v1136 = vrcp.pop %v1002
        %v1137 = vrcp.pop %v1004
        %v1138 = vrcp.pop %v1006
        %v1139 = vrcp.pop %v1008
        %v1140 = vrcp.pop %v1010
        %v1141 = vrcp.pop %v1012
        %v1142 = vrcp.pop %v1014
        %v1143 = vrcp.pop %v1016
        %v1144 = vrcp.pop %v1018
        %v1145 = vrcp.pop %v1020
        %v1146 = vrcp.pop %v1022
        %v1147 = vrcp.pop %v1024
        %v1148 = vrcp.pop %v1026
        %v1149 = vrcp.pop %v1028
        %v1150 = vmul.f32 %v1072, %v1134
        %v1151 = vmul.f32 %v1075, %v1135
        %v1152 = vmul.f32 %v1080, %v1136
        %v1153 = vmul.f32 %v1083, %v1137
        %v1154 = vmul.f32 %v1088, %v1138
        %v1155 = vmul.f32 %v1091, %v1139
        %v1156 = vmul.f32 %v1096, %v1140
        %v1157 = vmul.f32 %v1099, %v1141
        %v1158 = vmul.f32 %v1104, %v1142
        %v1159 = vmul.f32 %v1107, %v1143
        %v1160 = vmul.f32 %v1112, %v1144
        %v1161 = vmul.f32 %v1115, %v1145
        %v1162 = vmul.f32 %v1120, %v1146
        %v1163 = vmul.f32 %v1123, %v1147
        %v1164 = vmul.f32 %v1128, %v1148
        %v1165 = vmul.f32 %v1131, %v1149
        %1174 = vrot.lane.b32.xlu0 %v731, 96
        %v1175 = vpop.permute.xlu0 %1174
        %1176 = vrot.lane.b32.xlu0 %v732, 96
        %v1177 = vpop.permute.xlu0 %1176
        %1178 = vrot.lane.b32.xlu0 %v733, 96
        %v1179 = vpop.permute.xlu0 %1178
        %1180 = vrot.lane.b32.xlu0 %v734, 96
        %v1181 = vpop.permute.xlu0 %1180
        %1182 = vrot.lane.b32.xlu0 %v735, 96
        %v1183 = vpop.permute.xlu0 %1182
        %1184 = vrot.lane.b32.xlu0 %v736, 96
        %v1185 = vpop.permute.xlu0 %1184
        %1186 = vrot.lane.b32.xlu0 %v737, 96
        %v1187 = vpop.permute.xlu0 %1186
        %1188 = vrot.lane.b32.xlu0 %v738, 96
        %v1189 = vpop.permute.xlu0 %1188
        %1198 = vrot.lane.b32.xlu0 %v739, 96
        %v1199 = vpop.permute.xlu0 %1198
        %1200 = vrot.lane.b32.xlu0 %v740, 96
        %v1201 = vpop.permute.xlu0 %1200
        %1202 = vrot.lane.b32.xlu0 %v741, 96
        %v1203 = vpop.permute.xlu0 %1202
        %1204 = vrot.lane.b32.xlu0 %v742, 96
        %v1205 = vpop.permute.xlu0 %1204
        %1206 = vrot.lane.b32.xlu0 %v743, 96
        %v1207 = vpop.permute.xlu0 %1206
        %1208 = vrot.lane.b32.xlu0 %v744, 96
        %v1209 = vpop.permute.xlu0 %1208
        %1210 = vrot.lane.b32.xlu0 %v745, 96
        %v1211 = vpop.permute.xlu0 %1210
        %1212 = vrot.lane.b32.xlu0 %v746, 96
        %v1213 = vpop.permute.xlu0 %1212
        %v1215 = vsel %vm755, %v1175, 0
        %v1218 = vsel %vm755, %v1177, 0
        %v1221 = vsel %vm755, %v1179, 0
        %v1224 = vsel %vm755, %v1181, 0
        %v1227 = vsel %vm755, %v1183, 0
        %v1230 = vsel %vm755, %v1185, 0
        %v1233 = vsel %vm755, %v1187, 0
        %v1236 = vsel %vm755, %v1189, 0
        %v1239 = vsel %vm755, %v1199, 0
        %v1242 = vsel %vm755, %v1201, 0
        %v1245 = vsel %vm755, %v1203, 0
        %v1248 = vsel %vm755, %v1205, 0
        %v1251 = vsel %vm755, %v1207, 0
        %v1254 = vsel %vm755, %v1209, 0
        %v1257 = vsel %vm755, %v1211, 0
        %v1260 = vsel %vm755, %v1213, 0
        %1262 = vmatprep.subr.bf16.mxu0 0
        %1263 = vmatpush1.bf16.xpose.msra.mxu0 %v1239
        %1264 = vmatprep.subr.bf16.mxu0 0
        %1265 = vmatpush1.bf16.xpose.msra.mxu0 %v1242
        %1266 = vmatprep.subr.bf16.mxu0 0
        %1267 = vmatpush1.bf16.xpose.msra.mxu0 %v1245
        %1268 = vmatprep.subr.bf16.mxu0 0
        %1269 = vmatpush1.bf16.xpose.msra.mxu0 %v1248
        %1270 = vmatprep.subr.bf16.mxu0 0
        %1271 = vmatpush1.bf16.xpose.msra.mxu0 %v1251
        %1272 = vmatprep.subr.bf16.mxu0 0
        %1273 = vmatpush1.bf16.xpose.msra.mxu0 %v1254
        %1274 = vmatprep.subr.bf16.mxu0 0
        %1275 = vmatpush1.bf16.xpose.msra.mxu0 %v1257
        %1276 = vmatprep.subr.bf16.mxu0 0
        %1277 = vmatpush1.bf16.xpose.msra.mxu0 %v1260
        %1278 = vmatprep.subr.bf16.mxu0 0
        %1279 = vmatpush1.bf16.xpose.msra.mxu0 0
        %1280 = vmatprep.subr.bf16.mxu0 0
        %1281 = vmatpush1.bf16.xpose.msra.mxu0 0
        %1282 = vmatprep.subr.bf16.mxu0 0
        %1283 = vmatpush1.bf16.xpose.msra.mxu0 0
        %1284 = vmatprep.subr.bf16.mxu0 0
        %1285 = vmatpush1.bf16.xpose.msra.mxu0 0
        %1286 = vmatprep.subr.bf16.mxu0 0
        %1287 = vmatpush1.bf16.xpose.msra.mxu0 0
        %1288 = vmatprep.subr.bf16.mxu0 0
        %1289 = vmatpush1.bf16.xpose.msra.mxu0 0
        %1290 = vmatprep.subr.bf16.mxu0 0
        %1291 = vmatpush1.bf16.xpose.msra.mxu0 0
        %1292 = vmatprep.subr.bf16.mxu0 0
        %1293 = vmatpush1.bf16.xpose.msra.mxu0 0
        %1294 = vmatprep.mubr.bf16.mxu0 0
        %1295 = vmatmul.mubr.bf16.gmra.mrb[0].mxu0 %v1215
        %v1296 = vpop.f32.mrb[0].mxu0
        %v1297 = vadd.f32 0.0, %v1296
        %v1298 = vpop.f32.mrb[0].mxu0
        %v1299 = vpop.f32.mrb[0].mxu0
        %v1300 = vadd.f32 0.0, %v1299
        %v1301 = vpop.f32.mrb[0].mxu0
        %1302 = vmatprep.mubr.bf16.mxu0 0
        %1303 = vmatmul.mubr.bf16.gmra.mrb[0].mxu0 %v1218
        %v1304 = vpop.f32.mrb[0].mxu0
        %v1305 = vadd.f32 0.0, %v1304
        %v1306 = vpop.f32.mrb[0].mxu0
        %v1307 = vpop.f32.mrb[0].mxu0
        %v1308 = vadd.f32 0.0, %v1307
        %v1309 = vpop.f32.mrb[0].mxu0
        %1310 = vmatprep.mubr.bf16.mxu0 0
        %1311 = vmatmul.mubr.bf16.gmra.mrb[0].mxu0 %v1221
        %v1312 = vpop.f32.mrb[0].mxu0
        %v1313 = vadd.f32 0.0, %v1312
        %v1314 = vpop.f32.mrb[0].mxu0
        %v1315 = vpop.f32.mrb[0].mxu0
        %v1316 = vadd.f32 0.0, %v1315
        %v1317 = vpop.f32.mrb[0].mxu0
        %1318 = vmatprep.mubr.bf16.mxu0 0
        %1319 = vmatmul.mubr.bf16.gmra.mrb[0].mxu0 %v1224
        %v1320 = vpop.f32.mrb[0].mxu0
        %v1321 = vadd.f32 0.0, %v1320
        %v1322 = vpop.f32.mrb[0].mxu0
        %v1323 = vpop.f32.mrb[0].mxu0
        %v1324 = vadd.f32 0.0, %v1323
        %v1325 = vpop.f32.mrb[0].mxu0
        %1326 = vmatprep.mubr.bf16.mxu0 0
        %1327 = vmatmul.mubr.bf16.gmra.mrb[0].mxu0 %v1227
        %v1328 = vpop.f32.mrb[0].mxu0
        %v1329 = vadd.f32 0.0, %v1328
        %v1330 = vpop.f32.mrb[0].mxu0
        %v1331 = vpop.f32.mrb[0].mxu0
        %v1332 = vadd.f32 0.0, %v1331
        %v1333 = vpop.f32.mrb[0].mxu0
        %1334 = vmatprep.mubr.bf16.mxu0 0
        %1335 = vmatmul.mubr.bf16.gmra.mrb[0].mxu0 %v1230
        %v1336 = vpop.f32.mrb[0].mxu0
        %v1337 = vadd.f32 0.0, %v1336
        %v1338 = vpop.f32.mrb[0].mxu0
        %v1339 = vpop.f32.mrb[0].mxu0
        %v1340 = vadd.f32 0.0, %v1339
        %v1341 = vpop.f32.mrb[0].mxu0
        %1342 = vmatprep.mubr.bf16.mxu0 0
        %1343 = vmatmul.mubr.bf16.gmra.mrb[0].mxu0 %v1233
        %v1344 = vpop.f32.mrb[0].mxu0
        %v1345 = vadd.f32 0.0, %v1344
        %v1346 = vpop.f32.mrb[0].mxu0
        %v1347 = vpop.f32.mrb[0].mxu0
        %v1348 = vadd.f32 0.0, %v1347
        %v1349 = vpop.f32.mrb[0].mxu0
        %1350 = vmatprep.mubr.bf16.mxu0 0
        %1351 = vmatmul.mubr.bf16.gmra.mrb[0].mxu0 %v1236
        %v1352 = vpop.f32.mrb[0].mxu0
        %v1353 = vadd.f32 0.0, %v1352
        %v1354 = vpop.f32.mrb[0].mxu0
        %v1355 = vpop.f32.mrb[0].mxu0
        %v1356 = vadd.f32 0.0, %v1355
        %v1357 = vpop.f32.mrb[0].mxu0
        %1358 = vdwg.mxu0
        %v1359 = vsel %vm715, %v1297, -1e+30
        %v1360 = vsel %vm716, %v1300, -1e+30
        %v1361 = vsel %vm717, %v1305, -1e+30
        %v1362 = vsel %vm718, %v1308, -1e+30
        %v1363 = vsel %vm719, %v1313, -1e+30
        %v1364 = vsel %vm720, %v1316, -1e+30
        %v1365 = vsel %vm721, %v1321, -1e+30
        %v1366 = vsel %vm722, %v1324, -1e+30
        %v1367 = vsel %vm723, %v1329, -1e+30
        %v1368 = vsel %vm724, %v1332, -1e+30
        %v1369 = vsel %vm725, %v1337, -1e+30
        %v1370 = vsel %vm726, %v1340, -1e+30
        %v1371 = vsel %vm727, %v1345, -1e+30
        %v1372 = vsel %vm728, %v1348, -1e+30
        %v1373 = vsel %vm729, %v1353, -1e+30
        %v1374 = vsel %vm730, %v1356, -1e+30
        %1375 = vmax.xlane.f32.xlu0 %v1359
        %v1376 = vpop.xlane.xlu0 %1375
        %1377 = vmax.xlane.f32.xlu0 %v1360
        %v1378 = vpop.xlane.xlu0 %1377
        %1379 = vmax.xlane.f32.xlu0 %v1361
        %v1380 = vpop.xlane.xlu0 %1379
        %1381 = vmax.xlane.f32.xlu0 %v1362
        %v1382 = vpop.xlane.xlu0 %1381
        %1383 = vmax.xlane.f32.xlu0 %v1363
        %v1384 = vpop.xlane.xlu0 %1383
        %1385 = vmax.xlane.f32.xlu0 %v1364
        %v1386 = vpop.xlane.xlu0 %1385
        %1387 = vmax.xlane.f32.xlu0 %v1365
        %v1388 = vpop.xlane.xlu0 %1387
        %1389 = vmax.xlane.f32.xlu0 %v1366
        %v1390 = vpop.xlane.xlu0 %1389
        %1391 = vmax.xlane.f32.xlu0 %v1367
        %v1392 = vpop.xlane.xlu0 %1391
        %1393 = vmax.xlane.f32.xlu0 %v1368
        %v1394 = vpop.xlane.xlu0 %1393
        %1395 = vmax.xlane.f32.xlu0 %v1369
        %v1396 = vpop.xlane.xlu0 %1395
        %1397 = vmax.xlane.f32.xlu0 %v1370
        %v1398 = vpop.xlane.xlu0 %1397
        %1399 = vmax.xlane.f32.xlu0 %v1371
        %v1400 = vpop.xlane.xlu0 %1399
        %1401 = vmax.xlane.f32.xlu0 %v1372
        %v1402 = vpop.xlane.xlu0 %1401
        %1403 = vmax.xlane.f32.xlu0 %v1373
        %v1404 = vpop.xlane.xlu0 %1403
        %1405 = vmax.xlane.f32.xlu0 %v1374
        %v1406 = vpop.xlane.xlu0 %1405
        %v1407 = vsub.f32 %v1359, %v1376
        %v1408 = vsub.f32 %v1360, %v1378
        %v1409 = vsub.f32 %v1361, %v1380
        %v1410 = vsub.f32 %v1362, %v1382
        %v1411 = vsub.f32 %v1363, %v1384
        %v1412 = vsub.f32 %v1364, %v1386
        %v1413 = vsub.f32 %v1365, %v1388
        %v1414 = vsub.f32 %v1366, %v1390
        %v1415 = vsub.f32 %v1367, %v1392
        %v1416 = vsub.f32 %v1368, %v1394
        %v1417 = vsub.f32 %v1369, %v1396
        %v1418 = vsub.f32 %v1370, %v1398
        %v1419 = vsub.f32 %v1371, %v1400
        %v1420 = vsub.f32 %v1372, %v1402
        %v1421 = vsub.f32 %v1373, %v1404
        %v1422 = vsub.f32 %v1374, %v1406
        %v1423 = vmul.f32 %v1407, 1.442695
        %v1424 = vpow.pop %v1423
        %v1425 = vmul.f32 %v1408, 1.442695
        %v1426 = vpow.pop %v1425
        %v1427 = vmul.f32 %v1409, 1.442695
        %v1428 = vpow.pop %v1427
        %v1429 = vmul.f32 %v1410, 1.442695
        %v1430 = vpow.pop %v1429
        %v1431 = vmul.f32 %v1411, 1.442695
        %v1432 = vpow.pop %v1431
        %v1433 = vmul.f32 %v1412, 1.442695
        %v1434 = vpow.pop %v1433
        %v1435 = vmul.f32 %v1413, 1.442695
        %v1436 = vpow.pop %v1435
        %v1437 = vmul.f32 %v1414, 1.442695
        %v1438 = vpow.pop %v1437
        %v1439 = vmul.f32 %v1415, 1.442695
        %v1440 = vpow.pop %v1439
        %v1441 = vmul.f32 %v1416, 1.442695
        %v1442 = vpow.pop %v1441
        %v1443 = vmul.f32 %v1417, 1.442695
        %v1444 = vpow.pop %v1443
        %v1445 = vmul.f32 %v1418, 1.442695
        %v1446 = vpow.pop %v1445
        %v1447 = vmul.f32 %v1419, 1.442695
        %v1448 = vpow.pop %v1447
        %v1449 = vmul.f32 %v1420, 1.442695
        %v1450 = vpow.pop %v1449
        %v1451 = vmul.f32 %v1421, 1.442695
        %v1452 = vpow.pop %v1451
        %v1453 = vmul.f32 %v1422, 1.442695
        %v1454 = vpow.pop %v1453
        %1455 = vadd.xlane.f32.xlu0 %v1424
        %v1456 = vpop.xlane.xlu0 %1455
        %1457 = vadd.xlane.f32.xlu0 %v1426
        %v1458 = vpop.xlane.xlu0 %1457
        %1459 = vadd.xlane.f32.xlu0 %v1428
        %v1460 = vpop.xlane.xlu0 %1459
        %1461 = vadd.xlane.f32.xlu0 %v1430
        %v1462 = vpop.xlane.xlu0 %1461
        %1463 = vadd.xlane.f32.xlu0 %v1432
        %v1464 = vpop.xlane.xlu0 %1463
        %1465 = vadd.xlane.f32.xlu0 %v1434
        %v1466 = vpop.xlane.xlu0 %1465
        %1467 = vadd.xlane.f32.xlu0 %v1436
        %v1468 = vpop.xlane.xlu0 %1467
        %1469 = vadd.xlane.f32.xlu0 %v1438
        %v1470 = vpop.xlane.xlu0 %1469
        %1471 = vadd.xlane.f32.xlu0 %v1440
        %v1472 = vpop.xlane.xlu0 %1471
        %1473 = vadd.xlane.f32.xlu0 %v1442
        %v1474 = vpop.xlane.xlu0 %1473
        %1475 = vadd.xlane.f32.xlu0 %v1444
        %v1476 = vpop.xlane.xlu0 %1475
        %1477 = vadd.xlane.f32.xlu0 %v1446
        %v1478 = vpop.xlane.xlu0 %1477
        %1479 = vadd.xlane.f32.xlu0 %v1448
        %v1480 = vpop.xlane.xlu0 %1479
        %1481 = vadd.xlane.f32.xlu0 %v1450
        %v1482 = vpop.xlane.xlu0 %1481
        %1483 = vadd.xlane.f32.xlu0 %v1452
        %v1484 = vpop.xlane.xlu0 %1483
        %1485 = vadd.xlane.f32.xlu0 %v1454
        %v1486 = vpop.xlane.xlu0 %1485
        %v1487 = vpack.c.bf16 %v1426, %v1424
        %v1488 = vpack.c.bf16 %v1430, %v1428
        %v1489 = vpack.c.bf16 %v1434, %v1432
        %v1490 = vpack.c.bf16 %v1438, %v1436
        %v1491 = vpack.c.bf16 %v1442, %v1440
        %v1492 = vpack.c.bf16 %v1446, %v1444
        %v1493 = vpack.c.bf16 %v1450, %v1448
        %v1494 = vpack.c.bf16 %v1454, %v1452
        %1503 = vrot.lane.b32.xlu0 %v747, 96
        %v1504 = vpop.permute.xlu0 %1503
        %1505 = vrot.lane.b32.xlu0 %v748, 96
        %v1506 = vpop.permute.xlu0 %1505
        %1507 = vrot.lane.b32.xlu0 %v749, 96
        %v1508 = vpop.permute.xlu0 %1507
        %1509 = vrot.lane.b32.xlu0 %v750, 96
        %v1510 = vpop.permute.xlu0 %1509
        %1511 = vrot.lane.b32.xlu0 %v751, 96
        %v1512 = vpop.permute.xlu0 %1511
        %1513 = vrot.lane.b32.xlu0 %v752, 96
        %v1514 = vpop.permute.xlu0 %1513
        %1515 = vrot.lane.b32.xlu0 %v753, 96
        %v1516 = vpop.permute.xlu0 %1515
        %1517 = vrot.lane.b32.xlu0 %v754, 96
        %v1518 = vpop.permute.xlu0 %1517
        %1527 = vmatprep.subr.bf16.mxu0 0
        %1528 = vmatpush1.bf16.msra.mxu0 %v1504
        %1529 = vmatprep.subr.bf16.mxu0 0
        %1530 = vmatpush1.bf16.msra.mxu0 %v1506
        %1531 = vmatprep.subr.bf16.mxu0 0
        %1532 = vmatpush1.bf16.msra.mxu0 %v1508
        %1533 = vmatprep.subr.bf16.mxu0 0
        %1534 = vmatpush1.bf16.msra.mxu0 %v1510
        %1535 = vmatprep.subr.bf16.mxu0 0
        %1536 = vmatpush1.bf16.msra.mxu0 %v1512
        %1537 = vmatprep.subr.bf16.mxu0 0
        %1538 = vmatpush1.bf16.msra.mxu0 %v1514
        %1539 = vmatprep.subr.bf16.mxu0 0
        %1540 = vmatpush1.bf16.msra.mxu0 %v1516
        %1541 = vmatprep.subr.bf16.mxu0 0
        %1542 = vmatpush1.bf16.msra.mxu0 %v1518
        %1543 = vmatprep.subr.bf16.mxu0 0
        %1544 = vmatpush1.bf16.msra.mxu0 0
        %1545 = vmatprep.subr.bf16.mxu0 0
        %1546 = vmatpush1.bf16.msra.mxu0 0
        %1547 = vmatprep.subr.bf16.mxu0 0
        %1548 = vmatpush1.bf16.msra.mxu0 0
        %1549 = vmatprep.subr.bf16.mxu0 0
        %1550 = vmatpush1.bf16.msra.mxu0 0
        %1551 = vmatprep.subr.bf16.mxu0 0
        %1552 = vmatpush1.bf16.msra.mxu0 0
        %1553 = vmatprep.subr.bf16.mxu0 0
        %1554 = vmatpush1.bf16.msra.mxu0 0
        %1555 = vmatprep.subr.bf16.mxu0 0
        %1556 = vmatpush1.bf16.msra.mxu0 0
        %1557 = vmatprep.subr.bf16.mxu0 0
        %1558 = vmatpush1.bf16.msra.mxu0 0
        %1559 = vmatprep.mubr.bf16.mxu0 0
        %1560 = vmatmul.mubr.bf16.gmra.mrb[0].mxu0 %v1487
        %v1561 = vpop.f32.mrb[0].mxu0
        %v1562 = vadd.f32 0.0, %v1561
        %v1563 = vpop.f32.mrb[0].mxu0
        %v1564 = vpop.f32.mrb[0].mxu0
        %v1565 = vadd.f32 0.0, %v1564
        %v1566 = vpop.f32.mrb[0].mxu0
        %1567 = vmatprep.mubr.bf16.mxu0 0
        %1568 = vmatmul.mubr.bf16.gmra.mrb[0].mxu0 %v1488
        %v1569 = vpop.f32.mrb[0].mxu0
        %v1570 = vadd.f32 0.0, %v1569
        %v1571 = vpop.f32.mrb[0].mxu0
        %v1572 = vpop.f32.mrb[0].mxu0
        %v1573 = vadd.f32 0.0, %v1572
        %v1574 = vpop.f32.mrb[0].mxu0
        %1575 = vmatprep.mubr.bf16.mxu0 0
        %1576 = vmatmul.mubr.bf16.gmra.mrb[0].mxu0 %v1489
        %v1577 = vpop.f32.mrb[0].mxu0
        %v1578 = vadd.f32 0.0, %v1577
        %v1579 = vpop.f32.mrb[0].mxu0
        %v1580 = vpop.f32.mrb[0].mxu0
        %v1581 = vadd.f32 0.0, %v1580
        %v1582 = vpop.f32.mrb[0].mxu0
        %1583 = vmatprep.mubr.bf16.mxu0 0
        %1584 = vmatmul.mubr.bf16.gmra.mrb[0].mxu0 %v1490
        %v1585 = vpop.f32.mrb[0].mxu0
        %v1586 = vadd.f32 0.0, %v1585
        %v1587 = vpop.f32.mrb[0].mxu0
        %v1588 = vpop.f32.mrb[0].mxu0
        %v1589 = vadd.f32 0.0, %v1588
        %v1590 = vpop.f32.mrb[0].mxu0
        %1591 = vmatprep.mubr.bf16.mxu0 0
        %1592 = vmatmul.mubr.bf16.gmra.mrb[0].mxu0 %v1491
        %v1593 = vpop.f32.mrb[0].mxu0
        %v1594 = vadd.f32 0.0, %v1593
        %v1595 = vpop.f32.mrb[0].mxu0
        %v1596 = vpop.f32.mrb[0].mxu0
        %v1597 = vadd.f32 0.0, %v1596
        %v1598 = vpop.f32.mrb[0].mxu0
        %1599 = vmatprep.mubr.bf16.mxu0 0
        %1600 = vmatmul.mubr.bf16.gmra.mrb[0].mxu0 %v1492
        %v1601 = vpop.f32.mrb[0].mxu0
        %v1602 = vadd.f32 0.0, %v1601
        %v1603 = vpop.f32.mrb[0].mxu0
        %v1604 = vpop.f32.mrb[0].mxu0
        %v1605 = vadd.f32 0.0, %v1604
        %v1606 = vpop.f32.mrb[0].mxu0
        %1607 = vmatprep.mubr.bf16.mxu0 0
        %1608 = vmatmul.mubr.bf16.gmra.mrb[0].mxu0 %v1493
        %v1609 = vpop.f32.mrb[0].mxu0
        %v1610 = vadd.f32 0.0, %v1609
        %v1611 = vpop.f32.mrb[0].mxu0
        %v1612 = vpop.f32.mrb[0].mxu0
        %v1613 = vadd.f32 0.0, %v1612
        %v1614 = vpop.f32.mrb[0].mxu0
        %1615 = vmatprep.mubr.bf16.mxu0 0
        %1616 = vmatmul.mubr.bf16.gmra.mrb[0].mxu0 %v1494
        %v1617 = vpop.f32.mrb[0].mxu0
        %v1618 = vadd.f32 0.0, %v1617
        %v1619 = vpop.f32.mrb[0].mxu0
        %v1620 = vpop.f32.mrb[0].mxu0
        %v1621 = vadd.f32 0.0, %v1620
        %v1622 = vpop.f32.mrb[0].mxu0
        %1623 = vdwg.mxu0
        %v1624 = vrcp.pop %v1456
        %v1625 = vrcp.pop %v1458
        %v1626 = vrcp.pop %v1460
        %v1627 = vrcp.pop %v1462
        %v1628 = vrcp.pop %v1464
        %v1629 = vrcp.pop %v1466
        %v1630 = vrcp.pop %v1468
        %v1631 = vrcp.pop %v1470
        %v1632 = vrcp.pop %v1472
        %v1633 = vrcp.pop %v1474
        %v1634 = vrcp.pop %v1476
        %v1635 = vrcp.pop %v1478
        %v1636 = vrcp.pop %v1480
        %v1637 = vrcp.pop %v1482
        %v1638 = vrcp.pop %v1484
        %v1639 = vrcp.pop %v1486
        %v1640 = vmul.f32 %v1562, %v1624
        %v1641 = vmul.f32 %v1565, %v1625
        %v1642 = vmul.f32 %v1570, %v1626
        %v1643 = vmul.f32 %v1573, %v1627
        %v1644 = vmul.f32 %v1578, %v1628
        %v1645 = vmul.f32 %v1581, %v1629
        %v1646 = vmul.f32 %v1586, %v1630
        %v1647 = vmul.f32 %v1589, %v1631
        %v1648 = vmul.f32 %v1594, %v1632
        %v1649 = vmul.f32 %v1597, %v1633
        %v1650 = vmul.f32 %v1602, %v1634
        %v1651 = vmul.f32 %v1605, %v1635
        %v1652 = vmul.f32 %v1610, %v1636
        %v1653 = vmul.f32 %v1613, %v1637
        %v1654 = vmul.f32 %v1618, %v1638
        %v1655 = vmul.f32 %v1621, %v1639
        %1656 = vrot.lane.b32.xlu0 %v731, 64
        %v1657 = vpop.permute.xlu0 %1656
        %1658 = vrot.lane.b32.xlu0 %v732, 64
        %v1659 = vpop.permute.xlu0 %1658
        %1660 = vrot.lane.b32.xlu0 %v733, 64
        %v1661 = vpop.permute.xlu0 %1660
        %1662 = vrot.lane.b32.xlu0 %v734, 64
        %v1663 = vpop.permute.xlu0 %1662
        %1664 = vrot.lane.b32.xlu0 %v735, 64
        %v1665 = vpop.permute.xlu0 %1664
        %1666 = vrot.lane.b32.xlu0 %v736, 64
        %v1667 = vpop.permute.xlu0 %1666
        %1668 = vrot.lane.b32.xlu0 %v737, 64
        %v1669 = vpop.permute.xlu0 %1668
        %1670 = vrot.lane.b32.xlu0 %v738, 64
        %v1671 = vpop.permute.xlu0 %1670
        %1672 = vrot.lane.b32.xlu0 %v739, 64
        %v1673 = vpop.permute.xlu0 %1672
        %1674 = vrot.lane.b32.xlu0 %v740, 64
        %v1675 = vpop.permute.xlu0 %1674
        %1676 = vrot.lane.b32.xlu0 %v741, 64
        %v1677 = vpop.permute.xlu0 %1676
        %1678 = vrot.lane.b32.xlu0 %v742, 64
        %v1679 = vpop.permute.xlu0 %1678
        %1680 = vrot.lane.b32.xlu0 %v743, 64
        %v1681 = vpop.permute.xlu0 %1680
        %1682 = vrot.lane.b32.xlu0 %v744, 64
        %v1683 = vpop.permute.xlu0 %1682
        %1684 = vrot.lane.b32.xlu0 %v745, 64
        %v1685 = vpop.permute.xlu0 %1684
        %1686 = vrot.lane.b32.xlu0 %v746, 64
        %v1687 = vpop.permute.xlu0 %1686
        %v1689 = vsel %vm755, %v1657, 0
        %v1692 = vsel %vm755, %v1659, 0
        %v1695 = vsel %vm755, %v1661, 0
        %v1698 = vsel %vm755, %v1663, 0
        %v1701 = vsel %vm755, %v1665, 0
        %v1704 = vsel %vm755, %v1667, 0
        %v1707 = vsel %vm755, %v1669, 0
        %v1710 = vsel %vm755, %v1671, 0
        %v1713 = vsel %vm755, %v1673, 0
        %v1716 = vsel %vm755, %v1675, 0
        %v1719 = vsel %vm755, %v1677, 0
        %v1722 = vsel %vm755, %v1679, 0
        %v1725 = vsel %vm755, %v1681, 0
        %v1728 = vsel %vm755, %v1683, 0
        %v1731 = vsel %vm755, %v1685, 0
        %v1734 = vsel %vm755, %v1687, 0
        %1736 = vmatprep.subr.bf16.mxu0 0
        %1737 = vmatpush1.bf16.xpose.msra.mxu0 %v1713
        %1738 = vmatprep.subr.bf16.mxu0 0
        %1739 = vmatpush1.bf16.xpose.msra.mxu0 %v1716
        %1740 = vmatprep.subr.bf16.mxu0 0
        %1741 = vmatpush1.bf16.xpose.msra.mxu0 %v1719
        %1742 = vmatprep.subr.bf16.mxu0 0
        %1743 = vmatpush1.bf16.xpose.msra.mxu0 %v1722
        %1744 = vmatprep.subr.bf16.mxu0 0
        %1745 = vmatpush1.bf16.xpose.msra.mxu0 %v1725
        %1746 = vmatprep.subr.bf16.mxu0 0
        %1747 = vmatpush1.bf16.xpose.msra.mxu0 %v1728
        %1748 = vmatprep.subr.bf16.mxu0 0
        %1749 = vmatpush1.bf16.xpose.msra.mxu0 %v1731
        %1750 = vmatprep.subr.bf16.mxu0 0
        %1751 = vmatpush1.bf16.xpose.msra.mxu0 %v1734
        %1752 = vmatprep.subr.bf16.mxu0 0
        %1753 = vmatpush1.bf16.xpose.msra.mxu0 0
        %1754 = vmatprep.subr.bf16.mxu0 0
        %1755 = vmatpush1.bf16.xpose.msra.mxu0 0
        %1756 = vmatprep.subr.bf16.mxu0 0
        %1757 = vmatpush1.bf16.xpose.msra.mxu0 0
        %1758 = vmatprep.subr.bf16.mxu0 0
        %1759 = vmatpush1.bf16.xpose.msra.mxu0 0
        %1760 = vmatprep.subr.bf16.mxu0 0
        %1761 = vmatpush1.bf16.xpose.msra.mxu0 0
        %1762 = vmatprep.subr.bf16.mxu0 0
        %1763 = vmatpush1.bf16.xpose.msra.mxu0 0
        %1764 = vmatprep.subr.bf16.mxu0 0
        %1765 = vmatpush1.bf16.xpose.msra.mxu0 0
        %1766 = vmatprep.subr.bf16.mxu0 0
        %1767 = vmatpush1.bf16.xpose.msra.mxu0 0
        %1768 = vmatprep.mubr.bf16.mxu0 0
        %1769 = vmatmul.mubr.bf16.gmra.mrb[0].mxu0 %v1689
        %v1770 = vpop.f32.mrb[0].mxu0
        %v1771 = vadd.f32 0.0, %v1770
        %v1772 = vpop.f32.mrb[0].mxu0
        %v1773 = vpop.f32.mrb[0].mxu0
        %v1774 = vadd.f32 0.0, %v1773
        %v1775 = vpop.f32.mrb[0].mxu0
        %1776 = vmatprep.mubr.bf16.mxu0 0
        %1777 = vmatmul.mubr.bf16.gmra.mrb[0].mxu0 %v1692
        %v1778 = vpop.f32.mrb[0].mxu0
        %v1779 = vadd.f32 0.0, %v1778
        %v1780 = vpop.f32.mrb[0].mxu0
        %v1781 = vpop.f32.mrb[0].mxu0
        %v1782 = vadd.f32 0.0, %v1781
        %v1783 = vpop.f32.mrb[0].mxu0
        %1784 = vmatprep.mubr.bf16.mxu0 0
        %1785 = vmatmul.mubr.bf16.gmra.mrb[0].mxu0 %v1695
        %v1786 = vpop.f32.mrb[0].mxu0
        %v1787 = vadd.f32 0.0, %v1786
        %v1788 = vpop.f32.mrb[0].mxu0
        %v1789 = vpop.f32.mrb[0].mxu0
        %v1790 = vadd.f32 0.0, %v1789
        %v1791 = vpop.f32.mrb[0].mxu0
        %1792 = vmatprep.mubr.bf16.mxu0 0
        %1793 = vmatmul.mubr.bf16.gmra.mrb[0].mxu0 %v1698
        %v1794 = vpop.f32.mrb[0].mxu0
        %v1795 = vadd.f32 0.0, %v1794
        %v1796 = vpop.f32.mrb[0].mxu0
        %v1797 = vpop.f32.mrb[0].mxu0
        %v1798 = vadd.f32 0.0, %v1797
        %v1799 = vpop.f32.mrb[0].mxu0
        %1800 = vmatprep.mubr.bf16.mxu0 0
        %1801 = vmatmul.mubr.bf16.gmra.mrb[0].mxu0 %v1701
        %v1802 = vpop.f32.mrb[0].mxu0
        %v1803 = vadd.f32 0.0, %v1802
        %v1804 = vpop.f32.mrb[0].mxu0
        %v1805 = vpop.f32.mrb[0].mxu0
        %v1806 = vadd.f32 0.0, %v1805
        %v1807 = vpop.f32.mrb[0].mxu0
        %1808 = vmatprep.mubr.bf16.mxu0 0
        %1809 = vmatmul.mubr.bf16.gmra.mrb[0].mxu0 %v1704
        %v1810 = vpop.f32.mrb[0].mxu0
        %v1811 = vadd.f32 0.0, %v1810
        %v1812 = vpop.f32.mrb[0].mxu0
        %v1813 = vpop.f32.mrb[0].mxu0
        %v1814 = vadd.f32 0.0, %v1813
        %v1815 = vpop.f32.mrb[0].mxu0
        %1816 = vmatprep.mubr.bf16.mxu0 0
        %1817 = vmatmul.mubr.bf16.gmra.mrb[0].mxu0 %v1707
        %v1818 = vpop.f32.mrb[0].mxu0
        %v1819 = vadd.f32 0.0, %v1818
        %v1820 = vpop.f32.mrb[0].mxu0
        %v1821 = vpop.f32.mrb[0].mxu0
        %v1822 = vadd.f32 0.0, %v1821
        %v1823 = vpop.f32.mrb[0].mxu0
        %1824 = vmatprep.mubr.bf16.mxu0 0
        %1825 = vmatmul.mubr.bf16.gmra.mrb[0].mxu0 %v1710
        %v1826 = vpop.f32.mrb[0].mxu0
        %v1827 = vadd.f32 0.0, %v1826
        %v1828 = vpop.f32.mrb[0].mxu0
        %v1829 = vpop.f32.mrb[0].mxu0
        %v1830 = vadd.f32 0.0, %v1829
        %v1831 = vpop.f32.mrb[0].mxu0
        %1832 = vdwg.mxu0
        %v1833 = vsel %vm715, %v1771, -1e+30
        %v1834 = vsel %vm716, %v1774, -1e+30
        %v1835 = vsel %vm717, %v1779, -1e+30
        %v1836 = vsel %vm718, %v1782, -1e+30
        %v1837 = vsel %vm719, %v1787, -1e+30
        %v1838 = vsel %vm720, %v1790, -1e+30
        %v1839 = vsel %vm721, %v1795, -1e+30
        %v1840 = vsel %vm722, %v1798, -1e+30
        %v1841 = vsel %vm723, %v1803, -1e+30
        %v1842 = vsel %vm724, %v1806, -1e+30
        %v1843 = vsel %vm725, %v1811, -1e+30
        %v1844 = vsel %vm726, %v1814, -1e+30
        %v1845 = vsel %vm727, %v1819, -1e+30
        %v1846 = vsel %vm728, %v1822, -1e+30
        %v1847 = vsel %vm729, %v1827, -1e+30
        %v1848 = vsel %vm730, %v1830, -1e+30
        %1849 = vmax.xlane.f32.xlu0 %v1833
        %v1850 = vpop.xlane.xlu0 %1849
        %1851 = vmax.xlane.f32.xlu0 %v1834
        %v1852 = vpop.xlane.xlu0 %1851
        %1853 = vmax.xlane.f32.xlu0 %v1835
        %v1854 = vpop.xlane.xlu0 %1853
        %1855 = vmax.xlane.f32.xlu0 %v1836
        %v1856 = vpop.xlane.xlu0 %1855
        %1857 = vmax.xlane.f32.xlu0 %v1837
        %v1858 = vpop.xlane.xlu0 %1857
        %1859 = vmax.xlane.f32.xlu0 %v1838
        %v1860 = vpop.xlane.xlu0 %1859
        %1861 = vmax.xlane.f32.xlu0 %v1839
        %v1862 = vpop.xlane.xlu0 %1861
        %1863 = vmax.xlane.f32.xlu0 %v1840
        %v1864 = vpop.xlane.xlu0 %1863
        %1865 = vmax.xlane.f32.xlu0 %v1841
        %v1866 = vpop.xlane.xlu0 %1865
        %1867 = vmax.xlane.f32.xlu0 %v1842
        %v1868 = vpop.xlane.xlu0 %1867
        %1869 = vmax.xlane.f32.xlu0 %v1843
        %v1870 = vpop.xlane.xlu0 %1869
        %1871 = vmax.xlane.f32.xlu0 %v1844
        %v1872 = vpop.xlane.xlu0 %1871
        %1873 = vmax.xlane.f32.xlu0 %v1845
        %v1874 = vpop.xlane.xlu0 %1873
        %1875 = vmax.xlane.f32.xlu0 %v1846
        %v1876 = vpop.xlane.xlu0 %1875
        %1877 = vmax.xlane.f32.xlu0 %v1847
        %v1878 = vpop.xlane.xlu0 %1877
        %1879 = vmax.xlane.f32.xlu0 %v1848
        %v1880 = vpop.xlane.xlu0 %1879
        %v1881 = vsub.f32 %v1833, %v1850
        %v1882 = vsub.f32 %v1834, %v1852
        %v1883 = vsub.f32 %v1835, %v1854
        %v1884 = vsub.f32 %v1836, %v1856
        %v1885 = vsub.f32 %v1837, %v1858
        %v1886 = vsub.f32 %v1838, %v1860
        %v1887 = vsub.f32 %v1839, %v1862
        %v1888 = vsub.f32 %v1840, %v1864
        %v1889 = vsub.f32 %v1841, %v1866
        %v1890 = vsub.f32 %v1842, %v1868
        %v1891 = vsub.f32 %v1843, %v1870
        %v1892 = vsub.f32 %v1844, %v1872
        %v1893 = vsub.f32 %v1845, %v1874
        %v1894 = vsub.f32 %v1846, %v1876
        %v1895 = vsub.f32 %v1847, %v1878
        %v1896 = vsub.f32 %v1848, %v1880
        %v1897 = vmul.f32 %v1881, 1.442695
        %v1898 = vpow.pop %v1897
        %v1899 = vmul.f32 %v1882, 1.442695
        %v1900 = vpow.pop %v1899
        %v1901 = vmul.f32 %v1883, 1.442695
        %v1902 = vpow.pop %v1901
        %v1903 = vmul.f32 %v1884, 1.442695
        %v1904 = vpow.pop %v1903
        %v1905 = vmul.f32 %v1885, 1.442695
        %v1906 = vpow.pop %v1905
        %v1907 = vmul.f32 %v1886, 1.442695
        %v1908 = vpow.pop %v1907
        %v1909 = vmul.f32 %v1887, 1.442695
        %v1910 = vpow.pop %v1909
        %v1911 = vmul.f32 %v1888, 1.442695
        %v1912 = vpow.pop %v1911
        %v1913 = vmul.f32 %v1889, 1.442695
        %v1914 = vpow.pop %v1913
        %v1915 = vmul.f32 %v1890, 1.442695
        %v1916 = vpow.pop %v1915
        %v1917 = vmul.f32 %v1891, 1.442695
        %v1918 = vpow.pop %v1917
        %v1919 = vmul.f32 %v1892, 1.442695
        %v1920 = vpow.pop %v1919
        %v1921 = vmul.f32 %v1893, 1.442695
        %v1922 = vpow.pop %v1921
        %v1923 = vmul.f32 %v1894, 1.442695
        %v1924 = vpow.pop %v1923
        %v1925 = vmul.f32 %v1895, 1.442695
        %v1926 = vpow.pop %v1925
        %v1927 = vmul.f32 %v1896, 1.442695
        %v1928 = vpow.pop %v1927
        %1929 = vadd.xlane.f32.xlu0 %v1898
        %v1930 = vpop.xlane.xlu0 %1929
        %1931 = vadd.xlane.f32.xlu0 %v1900
        %v1932 = vpop.xlane.xlu0 %1931
        %1933 = vadd.xlane.f32.xlu0 %v1902
        %v1934 = vpop.xlane.xlu0 %1933
        %1935 = vadd.xlane.f32.xlu0 %v1904
        %v1936 = vpop.xlane.xlu0 %1935
        %1937 = vadd.xlane.f32.xlu0 %v1906
        %v1938 = vpop.xlane.xlu0 %1937
        %1939 = vadd.xlane.f32.xlu0 %v1908
        %v1940 = vpop.xlane.xlu0 %1939
        %1941 = vadd.xlane.f32.xlu0 %v1910
        %v1942 = vpop.xlane.xlu0 %1941
        %1943 = vadd.xlane.f32.xlu0 %v1912
        %v1944 = vpop.xlane.xlu0 %1943
        %1945 = vadd.xlane.f32.xlu0 %v1914
        %v1946 = vpop.xlane.xlu0 %1945
        %1947 = vadd.xlane.f32.xlu0 %v1916
        %v1948 = vpop.xlane.xlu0 %1947
        %1949 = vadd.xlane.f32.xlu0 %v1918
        %v1950 = vpop.xlane.xlu0 %1949
        %1951 = vadd.xlane.f32.xlu0 %v1920
        %v1952 = vpop.xlane.xlu0 %1951
        %1953 = vadd.xlane.f32.xlu0 %v1922
        %v1954 = vpop.xlane.xlu0 %1953
        %1955 = vadd.xlane.f32.xlu0 %v1924
        %v1956 = vpop.xlane.xlu0 %1955
        %1957 = vadd.xlane.f32.xlu0 %v1926
        %v1958 = vpop.xlane.xlu0 %1957
        %1959 = vadd.xlane.f32.xlu0 %v1928
        %v1960 = vpop.xlane.xlu0 %1959
        %v1961 = vpack.c.bf16 %v1900, %v1898
        %v1962 = vpack.c.bf16 %v1904, %v1902
        %v1963 = vpack.c.bf16 %v1908, %v1906
        %v1964 = vpack.c.bf16 %v1912, %v1910
        %v1965 = vpack.c.bf16 %v1916, %v1914
        %v1966 = vpack.c.bf16 %v1920, %v1918
        %v1967 = vpack.c.bf16 %v1924, %v1922
        %v1968 = vpack.c.bf16 %v1928, %v1926
        %1969 = vrot.lane.b32.xlu0 %v747, 64
        %v1970 = vpop.permute.xlu0 %1969
        %1971 = vrot.lane.b32.xlu0 %v748, 64
        %v1972 = vpop.permute.xlu0 %1971
        %1973 = vrot.lane.b32.xlu0 %v749, 64
        %v1974 = vpop.permute.xlu0 %1973
        %1975 = vrot.lane.b32.xlu0 %v750, 64
        %v1976 = vpop.permute.xlu0 %1975
        %1977 = vrot.lane.b32.xlu0 %v751, 64
        %v1978 = vpop.permute.xlu0 %1977
        %1979 = vrot.lane.b32.xlu0 %v752, 64
        %v1980 = vpop.permute.xlu0 %1979
        %1981 = vrot.lane.b32.xlu0 %v753, 64
        %v1982 = vpop.permute.xlu0 %1981
        %1983 = vrot.lane.b32.xlu0 %v754, 64
        %v1984 = vpop.permute.xlu0 %1983
        %1993 = vmatprep.subr.bf16.mxu0 0
        %1994 = vmatpush1.bf16.msra.mxu0 %v1970
        %1995 = vmatprep.subr.bf16.mxu0 0
        %1996 = vmatpush1.bf16.msra.mxu0 %v1972
        %1997 = vmatprep.subr.bf16.mxu0 0
        %1998 = vmatpush1.bf16.msra.mxu0 %v1974
        %1999 = vmatprep.subr.bf16.mxu0 0
        %2000 = vmatpush1.bf16.msra.mxu0 %v1976
        %2001 = vmatprep.subr.bf16.mxu0 0
        %2002 = vmatpush1.bf16.msra.mxu0 %v1978
        %2003 = vmatprep.subr.bf16.mxu0 0
        %2004 = vmatpush1.bf16.msra.mxu0 %v1980
        %2005 = vmatprep.subr.bf16.mxu0 0
        %2006 = vmatpush1.bf16.msra.mxu0 %v1982
        %2007 = vmatprep.subr.bf16.mxu0 0
        %2008 = vmatpush1.bf16.msra.mxu0 %v1984
        %2009 = vmatprep.subr.bf16.mxu0 0
        %2010 = vmatpush1.bf16.msra.mxu0 0
        %2011 = vmatprep.subr.bf16.mxu0 0
        %2012 = vmatpush1.bf16.msra.mxu0 0
        %2013 = vmatprep.subr.bf16.mxu0 0
        %2014 = vmatpush1.bf16.msra.mxu0 0
        %2015 = vmatprep.subr.bf16.mxu0 0
        %2016 = vmatpush1.bf16.msra.mxu0 0
        %2017 = vmatprep.subr.bf16.mxu0 0
        %2018 = vmatpush1.bf16.msra.mxu0 0
        %2019 = vmatprep.subr.bf16.mxu0 0
        %2020 = vmatpush1.bf16.msra.mxu0 0
        %2021 = vmatprep.subr.bf16.mxu0 0
        %2022 = vmatpush1.bf16.msra.mxu0 0
        %2023 = vmatprep.subr.bf16.mxu0 0
        %2024 = vmatpush1.bf16.msra.mxu0 0
        %2025 = vmatprep.mubr.bf16.mxu0 0
        %2026 = vmatmul.mubr.bf16.gmra.mrb[0].mxu0 %v1961
        %v2027 = vpop.f32.mrb[0].mxu0
        %v2028 = vadd.f32 0.0, %v2027
        %v2029 = vpop.f32.mrb[0].mxu0
        %v2030 = vpop.f32.mrb[0].mxu0
        %v2031 = vadd.f32 0.0, %v2030
        %v2032 = vpop.f32.mrb[0].mxu0
        %2033 = vmatprep.mubr.bf16.mxu0 0
        %2034 = vmatmul.mubr.bf16.gmra.mrb[0].mxu0 %v1962
        %v2035 = vpop.f32.mrb[0].mxu0
        %v2036 = vadd.f32 0.0, %v2035
        %v2037 = vpop.f32.mrb[0].mxu0
        %v2038 = vpop.f32.mrb[0].mxu0
        %v2039 = vadd.f32 0.0, %v2038
        %v2040 = vpop.f32.mrb[0].mxu0
        %2041 = vmatprep.mubr.bf16.mxu0 0
        %2042 = vmatmul.mubr.bf16.gmra.mrb[0].mxu0 %v1963
        %v2043 = vpop.f32.mrb[0].mxu0
        %v2044 = vadd.f32 0.0, %v2043
        %v2045 = vpop.f32.mrb[0].mxu0
        %v2046 = vpop.f32.mrb[0].mxu0
        %v2047 = vadd.f32 0.0, %v2046
        %v2048 = vpop.f32.mrb[0].mxu0
        %2049 = vmatprep.mubr.bf16.mxu0 0
        %2050 = vmatmul.mubr.bf16.gmra.mrb[0].mxu0 %v1964
        %v2051 = vpop.f32.mrb[0].mxu0
        %v2052 = vadd.f32 0.0, %v2051
        %v2053 = vpop.f32.mrb[0].mxu0
        %v2054 = vpop.f32.mrb[0].mxu0
        %v2055 = vadd.f32 0.0, %v2054
        %v2056 = vpop.f32.mrb[0].mxu0
        %2057 = vmatprep.mubr.bf16.mxu0 0
        %2058 = vmatmul.mubr.bf16.gmra.mrb[0].mxu0 %v1965
        %v2059 = vpop.f32.mrb[0].mxu0
        %v2060 = vadd.f32 0.0, %v2059
        %v2061 = vpop.f32.mrb[0].mxu0
        %v2062 = vpop.f32.mrb[0].mxu0
        %v2063 = vadd.f32 0.0, %v2062
        %v2064 = vpop.f32.mrb[0].mxu0
        %2065 = vmatprep.mubr.bf16.mxu0 0
        %2066 = vmatmul.mubr.bf16.gmra.mrb[0].mxu0 %v1966
        %v2067 = vpop.f32.mrb[0].mxu0
        %v2068 = vadd.f32 0.0, %v2067
        %v2069 = vpop.f32.mrb[0].mxu0
        %v2070 = vpop.f32.mrb[0].mxu0
        %v2071 = vadd.f32 0.0, %v2070
        %v2072 = vpop.f32.mrb[0].mxu0
        %2073 = vmatprep.mubr.bf16.mxu0 0
        %2074 = vmatmul.mubr.bf16.gmra.mrb[0].mxu0 %v1967
        %v2075 = vpop.f32.mrb[0].mxu0
        %v2076 = vadd.f32 0.0, %v2075
        %v2077 = vpop.f32.mrb[0].mxu0
        %v2078 = vpop.f32.mrb[0].mxu0
        %v2079 = vadd.f32 0.0, %v2078
        %v2080 = vpop.f32.mrb[0].mxu0
        %2081 = vmatprep.mubr.bf16.mxu0 0
        %2082 = vmatmul.mubr.bf16.gmra.mrb[0].mxu0 %v1968
        %v2083 = vpop.f32.mrb[0].mxu0
        %v2084 = vadd.f32 0.0, %v2083
        %v2085 = vpop.f32.mrb[0].mxu0
        %v2086 = vpop.f32.mrb[0].mxu0
        %v2087 = vadd.f32 0.0, %v2086
        %v2088 = vpop.f32.mrb[0].mxu0
        %2089 = vdwg.mxu0
        %v2090 = vrcp.pop %v1930
        %v2091 = vrcp.pop %v1932
        %v2092 = vrcp.pop %v1934
        %v2093 = vrcp.pop %v1936
        %v2094 = vrcp.pop %v1938
        %v2095 = vrcp.pop %v1940
        %v2096 = vrcp.pop %v1942
        %v2097 = vrcp.pop %v1944
        %v2098 = vrcp.pop %v1946
        %v2099 = vrcp.pop %v1948
        %v2100 = vrcp.pop %v1950
        %v2101 = vrcp.pop %v1952
        %v2102 = vrcp.pop %v1954
        %v2103 = vrcp.pop %v1956
        %v2104 = vrcp.pop %v1958
        %v2105 = vrcp.pop %v1960
        %v2106 = vmul.f32 %v2028, %v2090
        %v2107 = vmul.f32 %v2031, %v2091
        %v2108 = vmul.f32 %v2036, %v2092
        %v2109 = vmul.f32 %v2039, %v2093
        %v2110 = vmul.f32 %v2044, %v2094
        %v2111 = vmul.f32 %v2047, %v2095
        %v2112 = vmul.f32 %v2052, %v2096
        %v2113 = vmul.f32 %v2055, %v2097
        %v2114 = vmul.f32 %v2060, %v2098
        %v2115 = vmul.f32 %v2063, %v2099
        %v2116 = vmul.f32 %v2068, %v2100
        %v2117 = vmul.f32 %v2071, %v2101
        %v2118 = vmul.f32 %v2076, %v2102
        %v2119 = vmul.f32 %v2079, %v2103
        %v2120 = vmul.f32 %v2084, %v2104
        %v2121 = vmul.f32 %v2087, %v2105
        %2122 = vrot.lane.b32.xlu0 %v731, 32
        %v2123 = vpop.permute.xlu0 %2122
        %2124 = vrot.lane.b32.xlu0 %v732, 32
        %v2125 = vpop.permute.xlu0 %2124
        %2126 = vrot.lane.b32.xlu0 %v733, 32
        %v2127 = vpop.permute.xlu0 %2126
        %2128 = vrot.lane.b32.xlu0 %v734, 32
        %v2129 = vpop.permute.xlu0 %2128
        %2130 = vrot.lane.b32.xlu0 %v735, 32
        %v2131 = vpop.permute.xlu0 %2130
        %2132 = vrot.lane.b32.xlu0 %v736, 32
        %v2133 = vpop.permute.xlu0 %2132
        %2134 = vrot.lane.b32.xlu0 %v737, 32
        %v2135 = vpop.permute.xlu0 %2134
        %2136 = vrot.lane.b32.xlu0 %v738, 32
        %v2137 = vpop.permute.xlu0 %2136
        %2138 = vrot.lane.b32.xlu0 %v739, 32
        %v2139 = vpop.permute.xlu0 %2138
        %2140 = vrot.lane.b32.xlu0 %v740, 32
        %v2141 = vpop.permute.xlu0 %2140
        %2142 = vrot.lane.b32.xlu0 %v741, 32
        %v2143 = vpop.permute.xlu0 %2142
        %2144 = vrot.lane.b32.xlu0 %v742, 32
        %v2145 = vpop.permute.xlu0 %2144
        %2146 = vrot.lane.b32.xlu0 %v743, 32
        %v2147 = vpop.permute.xlu0 %2146
        %2148 = vrot.lane.b32.xlu0 %v744, 32
        %v2149 = vpop.permute.xlu0 %2148
        %2150 = vrot.lane.b32.xlu0 %v745, 32
        %v2151 = vpop.permute.xlu0 %2150
        %2152 = vrot.lane.b32.xlu0 %v746, 32
        %v2153 = vpop.permute.xlu0 %2152
        %v2155 = vsel %vm755, %v2123, 0
        %v2158 = vsel %vm755, %v2125, 0
        %v2161 = vsel %vm755, %v2127, 0
        %v2164 = vsel %vm755, %v2129, 0
        %v2167 = vsel %vm755, %v2131, 0
        %v2170 = vsel %vm755, %v2133, 0
        %v2173 = vsel %vm755, %v2135, 0
        %v2176 = vsel %vm755, %v2137, 0
        %v2179 = vsel %vm755, %v2139, 0
        %v2182 = vsel %vm755, %v2141, 0
        %v2185 = vsel %vm755, %v2143, 0
        %v2188 = vsel %vm755, %v2145, 0
        %v2191 = vsel %vm755, %v2147, 0
        %v2194 = vsel %vm755, %v2149, 0
        %v2197 = vsel %vm755, %v2151, 0
        %v2200 = vsel %vm755, %v2153, 0
        %2202 = vmatprep.subr.bf16.mxu0 0
        %2203 = vmatpush1.bf16.xpose.msra.mxu0 %v2179
        %2204 = vmatprep.subr.bf16.mxu0 0
        %2205 = vmatpush1.bf16.xpose.msra.mxu0 %v2182
        %2206 = vmatprep.subr.bf16.mxu0 0
        %2207 = vmatpush1.bf16.xpose.msra.mxu0 %v2185
        %2208 = vmatprep.subr.bf16.mxu0 0
        %2209 = vmatpush1.bf16.xpose.msra.mxu0 %v2188
        %2210 = vmatprep.subr.bf16.mxu0 0
        %2211 = vmatpush1.bf16.xpose.msra.mxu0 %v2191
        %2212 = vmatprep.subr.bf16.mxu0 0
        %2213 = vmatpush1.bf16.xpose.msra.mxu0 %v2194
        %2214 = vmatprep.subr.bf16.mxu0 0
        %2215 = vmatpush1.bf16.xpose.msra.mxu0 %v2197
        %2216 = vmatprep.subr.bf16.mxu0 0
        %2217 = vmatpush1.bf16.xpose.msra.mxu0 %v2200
        %2218 = vmatprep.subr.bf16.mxu0 0
        %2219 = vmatpush1.bf16.xpose.msra.mxu0 0
        %2220 = vmatprep.subr.bf16.mxu0 0
        %2221 = vmatpush1.bf16.xpose.msra.mxu0 0
        %2222 = vmatprep.subr.bf16.mxu0 0
        %2223 = vmatpush1.bf16.xpose.msra.mxu0 0
        %2224 = vmatprep.subr.bf16.mxu0 0
        %2225 = vmatpush1.bf16.xpose.msra.mxu0 0
        %2226 = vmatprep.subr.bf16.mxu0 0
        %2227 = vmatpush1.bf16.xpose.msra.mxu0 0
        %2228 = vmatprep.subr.bf16.mxu0 0
        %2229 = vmatpush1.bf16.xpose.msra.mxu0 0
        %2230 = vmatprep.subr.bf16.mxu0 0
        %2231 = vmatpush1.bf16.xpose.msra.mxu0 0
        %2232 = vmatprep.subr.bf16.mxu0 0
        %2233 = vmatpush1.bf16.xpose.msra.mxu0 0
        %2234 = vmatprep.mubr.bf16.mxu0 0
        %2235 = vmatmul.mubr.bf16.gmra.mrb[0].mxu0 %v2155
        %v2236 = vpop.f32.mrb[0].mxu0
        %v2237 = vadd.f32 0.0, %v2236
        %v2238 = vpop.f32.mrb[0].mxu0
        %v2239 = vpop.f32.mrb[0].mxu0
        %v2240 = vadd.f32 0.0, %v2239
        %v2241 = vpop.f32.mrb[0].mxu0
        %2242 = vmatprep.mubr.bf16.mxu0 0
        %2243 = vmatmul.mubr.bf16.gmra.mrb[0].mxu0 %v2158
        %v2244 = vpop.f32.mrb[0].mxu0
        %v2245 = vadd.f32 0.0, %v2244
        %v2246 = vpop.f32.mrb[0].mxu0
        %v2247 = vpop.f32.mrb[0].mxu0
        %v2248 = vadd.f32 0.0, %v2247
        %v2249 = vpop.f32.mrb[0].mxu0
        %2250 = vmatprep.mubr.bf16.mxu0 0
        %2251 = vmatmul.mubr.bf16.gmra.mrb[0].mxu0 %v2161
        %v2252 = vpop.f32.mrb[0].mxu0
        %v2253 = vadd.f32 0.0, %v2252
        %v2254 = vpop.f32.mrb[0].mxu0
        %v2255 = vpop.f32.mrb[0].mxu0
        %v2256 = vadd.f32 0.0, %v2255
        %v2257 = vpop.f32.mrb[0].mxu0
        %2258 = vmatprep.mubr.bf16.mxu0 0
        %2259 = vmatmul.mubr.bf16.gmra.mrb[0].mxu0 %v2164
        %v2260 = vpop.f32.mrb[0].mxu0
        %v2261 = vadd.f32 0.0, %v2260
        %v2262 = vpop.f32.mrb[0].mxu0
        %v2263 = vpop.f32.mrb[0].mxu0
        %v2264 = vadd.f32 0.0, %v2263
        %v2265 = vpop.f32.mrb[0].mxu0
        %2266 = vmatprep.mubr.bf16.mxu0 0
        %2267 = vmatmul.mubr.bf16.gmra.mrb[0].mxu0 %v2167
        %v2268 = vpop.f32.mrb[0].mxu0
        %v2269 = vadd.f32 0.0, %v2268
        %v2270 = vpop.f32.mrb[0].mxu0
        %v2271 = vpop.f32.mrb[0].mxu0
        %v2272 = vadd.f32 0.0, %v2271
        %v2273 = vpop.f32.mrb[0].mxu0
        %2274 = vmatprep.mubr.bf16.mxu0 0
        %2275 = vmatmul.mubr.bf16.gmra.mrb[0].mxu0 %v2170
        %v2276 = vpop.f32.mrb[0].mxu0
        %v2277 = vadd.f32 0.0, %v2276
        %v2278 = vpop.f32.mrb[0].mxu0
        %v2279 = vpop.f32.mrb[0].mxu0
        %v2280 = vadd.f32 0.0, %v2279
        %v2281 = vpop.f32.mrb[0].mxu0
        %2282 = vmatprep.mubr.bf16.mxu0 0
        %2283 = vmatmul.mubr.bf16.gmra.mrb[0].mxu0 %v2173
        %v2284 = vpop.f32.mrb[0].mxu0
        %v2285 = vadd.f32 0.0, %v2284
        %v2286 = vpop.f32.mrb[0].mxu0
        %v2287 = vpop.f32.mrb[0].mxu0
        %v2288 = vadd.f32 0.0, %v2287
        %v2289 = vpop.f32.mrb[0].mxu0
        %2290 = vmatprep.mubr.bf16.mxu0 0
        %2291 = vmatmul.mubr.bf16.gmra.mrb[0].mxu0 %v2176
        %v2292 = vpop.f32.mrb[0].mxu0
        %v2293 = vadd.f32 0.0, %v2292
        %v2294 = vpop.f32.mrb[0].mxu0
        %v2295 = vpop.f32.mrb[0].mxu0
        %v2296 = vadd.f32 0.0, %v2295
        %v2297 = vpop.f32.mrb[0].mxu0
        %2298 = vdwg.mxu0
        %v2299 = vsel %vm715, %v2237, -1e+30
        %v2300 = vsel %vm716, %v2240, -1e+30
        %v2301 = vsel %vm717, %v2245, -1e+30
        %v2302 = vsel %vm718, %v2248, -1e+30
        %v2303 = vsel %vm719, %v2253, -1e+30
        %v2304 = vsel %vm720, %v2256, -1e+30
        %v2305 = vsel %vm721, %v2261, -1e+30
        %v2306 = vsel %vm722, %v2264, -1e+30
        %v2307 = vsel %vm723, %v2269, -1e+30
        %v2308 = vsel %vm724, %v2272, -1e+30
        %v2309 = vsel %vm725, %v2277, -1e+30
        %v2310 = vsel %vm726, %v2280, -1e+30
        %v2311 = vsel %vm727, %v2285, -1e+30
        %v2312 = vsel %vm728, %v2288, -1e+30
        %v2313 = vsel %vm729, %v2293, -1e+30
        %v2314 = vsel %vm730, %v2296, -1e+30
        %2315 = vmax.xlane.f32.xlu0 %v2299
        %v2316 = vpop.xlane.xlu0 %2315
        %2317 = vmax.xlane.f32.xlu0 %v2300
        %v2318 = vpop.xlane.xlu0 %2317
        %2319 = vmax.xlane.f32.xlu0 %v2301
        %v2320 = vpop.xlane.xlu0 %2319
        %2321 = vmax.xlane.f32.xlu0 %v2302
        %v2322 = vpop.xlane.xlu0 %2321
        %2323 = vmax.xlane.f32.xlu0 %v2303
        %v2324 = vpop.xlane.xlu0 %2323
        %2325 = vmax.xlane.f32.xlu0 %v2304
        %v2326 = vpop.xlane.xlu0 %2325
        %2327 = vmax.xlane.f32.xlu0 %v2305
        %v2328 = vpop.xlane.xlu0 %2327
        %2329 = vmax.xlane.f32.xlu0 %v2306
        %v2330 = vpop.xlane.xlu0 %2329
        %2331 = vmax.xlane.f32.xlu0 %v2307
        %v2332 = vpop.xlane.xlu0 %2331
        %2333 = vmax.xlane.f32.xlu0 %v2308
        %v2334 = vpop.xlane.xlu0 %2333
        %2335 = vmax.xlane.f32.xlu0 %v2309
        %v2336 = vpop.xlane.xlu0 %2335
        %2337 = vmax.xlane.f32.xlu0 %v2310
        %v2338 = vpop.xlane.xlu0 %2337
        %2339 = vmax.xlane.f32.xlu0 %v2311
        %v2340 = vpop.xlane.xlu0 %2339
        %2341 = vmax.xlane.f32.xlu0 %v2312
        %v2342 = vpop.xlane.xlu0 %2341
        %2343 = vmax.xlane.f32.xlu0 %v2313
        %v2344 = vpop.xlane.xlu0 %2343
        %2345 = vmax.xlane.f32.xlu0 %v2314
        %v2346 = vpop.xlane.xlu0 %2345
        %v2347 = vsub.f32 %v2299, %v2316
        %v2348 = vsub.f32 %v2300, %v2318
        %v2349 = vsub.f32 %v2301, %v2320
        %v2350 = vsub.f32 %v2302, %v2322
        %v2351 = vsub.f32 %v2303, %v2324
        %v2352 = vsub.f32 %v2304, %v2326
        %v2353 = vsub.f32 %v2305, %v2328
        %v2354 = vsub.f32 %v2306, %v2330
        %v2355 = vsub.f32 %v2307, %v2332
        %v2356 = vsub.f32 %v2308, %v2334
        %v2357 = vsub.f32 %v2309, %v2336
        %v2358 = vsub.f32 %v2310, %v2338
        %v2359 = vsub.f32 %v2311, %v2340
        %v2360 = vsub.f32 %v2312, %v2342
        %v2361 = vsub.f32 %v2313, %v2344
        %v2362 = vsub.f32 %v2314, %v2346
        %v2363 = vmul.f32 %v2347, 1.442695
        %v2364 = vpow.pop %v2363
        %v2365 = vmul.f32 %v2348, 1.442695
        %v2366 = vpow.pop %v2365
        %v2367 = vmul.f32 %v2349, 1.442695
        %v2368 = vpow.pop %v2367
        %v2369 = vmul.f32 %v2350, 1.442695
        %v2370 = vpow.pop %v2369
        %v2371 = vmul.f32 %v2351, 1.442695
        %v2372 = vpow.pop %v2371
        %v2373 = vmul.f32 %v2352, 1.442695
        %v2374 = vpow.pop %v2373
        %v2375 = vmul.f32 %v2353, 1.442695
        %v2376 = vpow.pop %v2375
        %v2377 = vmul.f32 %v2354, 1.442695
        %v2378 = vpow.pop %v2377
        %v2379 = vmul.f32 %v2355, 1.442695
        %v2380 = vpow.pop %v2379
        %v2381 = vmul.f32 %v2356, 1.442695
        %v2382 = vpow.pop %v2381
        %v2383 = vmul.f32 %v2357, 1.442695
        %v2384 = vpow.pop %v2383
        %v2385 = vmul.f32 %v2358, 1.442695
        %v2386 = vpow.pop %v2385
        %v2387 = vmul.f32 %v2359, 1.442695
        %v2388 = vpow.pop %v2387
        %v2389 = vmul.f32 %v2360, 1.442695
        %v2390 = vpow.pop %v2389
        %v2391 = vmul.f32 %v2361, 1.442695
        %v2392 = vpow.pop %v2391
        %v2393 = vmul.f32 %v2362, 1.442695
        %v2394 = vpow.pop %v2393
        %2395 = vadd.xlane.f32.xlu0 %v2364
        %v2396 = vpop.xlane.xlu0 %2395
        %2397 = vadd.xlane.f32.xlu0 %v2366
        %v2398 = vpop.xlane.xlu0 %2397
        %2399 = vadd.xlane.f32.xlu0 %v2368
        %v2400 = vpop.xlane.xlu0 %2399
        %2401 = vadd.xlane.f32.xlu0 %v2370
        %v2402 = vpop.xlane.xlu0 %2401
        %2403 = vadd.xlane.f32.xlu0 %v2372
        %v2404 = vpop.xlane.xlu0 %2403
        %2405 = vadd.xlane.f32.xlu0 %v2374
        %v2406 = vpop.xlane.xlu0 %2405
        %2407 = vadd.xlane.f32.xlu0 %v2376
        %v2408 = vpop.xlane.xlu0 %2407
        %2409 = vadd.xlane.f32.xlu0 %v2378
        %v2410 = vpop.xlane.xlu0 %2409
        %2411 = vadd.xlane.f32.xlu0 %v2380
        %v2412 = vpop.xlane.xlu0 %2411
        %2413 = vadd.xlane.f32.xlu0 %v2382
        %v2414 = vpop.xlane.xlu0 %2413
        %2415 = vadd.xlane.f32.xlu0 %v2384
        %v2416 = vpop.xlane.xlu0 %2415
        %2417 = vadd.xlane.f32.xlu0 %v2386
        %v2418 = vpop.xlane.xlu0 %2417
        %2419 = vadd.xlane.f32.xlu0 %v2388
        %v2420 = vpop.xlane.xlu0 %2419
        %2421 = vadd.xlane.f32.xlu0 %v2390
        %v2422 = vpop.xlane.xlu0 %2421
        %2423 = vadd.xlane.f32.xlu0 %v2392
        %v2424 = vpop.xlane.xlu0 %2423
        %2425 = vadd.xlane.f32.xlu0 %v2394
        %v2426 = vpop.xlane.xlu0 %2425
        %v2427 = vpack.c.bf16 %v2366, %v2364
        %v2428 = vpack.c.bf16 %v2370, %v2368
        %v2429 = vpack.c.bf16 %v2374, %v2372
        %v2430 = vpack.c.bf16 %v2378, %v2376
        %v2431 = vpack.c.bf16 %v2382, %v2380
        %v2432 = vpack.c.bf16 %v2386, %v2384
        %v2433 = vpack.c.bf16 %v2390, %v2388
        %v2434 = vpack.c.bf16 %v2394, %v2392
        %2435 = vrot.lane.b32.xlu0 %v747, 32
        %v2436 = vpop.permute.xlu0 %2435
        %2437 = vrot.lane.b32.xlu0 %v748, 32
        %v2438 = vpop.permute.xlu0 %2437
        %2439 = vrot.lane.b32.xlu0 %v749, 32
        %v2440 = vpop.permute.xlu0 %2439
        %2441 = vrot.lane.b32.xlu0 %v750, 32
        %v2442 = vpop.permute.xlu0 %2441
        %2443 = vrot.lane.b32.xlu0 %v751, 32
        %v2444 = vpop.permute.xlu0 %2443
        %2445 = vrot.lane.b32.xlu0 %v752, 32
        %v2446 = vpop.permute.xlu0 %2445
        %2447 = vrot.lane.b32.xlu0 %v753, 32
        %v2448 = vpop.permute.xlu0 %2447
        %2449 = vrot.lane.b32.xlu0 %v754, 32
        %v2450 = vpop.permute.xlu0 %2449
        %2459 = vmatprep.subr.bf16.mxu0 0
        %2460 = vmatpush1.bf16.msra.mxu0 %v2436
        %2461 = vmatprep.subr.bf16.mxu0 0
        %2462 = vmatpush1.bf16.msra.mxu0 %v2438
        %2463 = vmatprep.subr.bf16.mxu0 0
        %2464 = vmatpush1.bf16.msra.mxu0 %v2440
        %2465 = vmatprep.subr.bf16.mxu0 0
        %2466 = vmatpush1.bf16.msra.mxu0 %v2442
        %2467 = vmatprep.subr.bf16.mxu0 0
        %2468 = vmatpush1.bf16.msra.mxu0 %v2444
        %2469 = vmatprep.subr.bf16.mxu0 0
        %2470 = vmatpush1.bf16.msra.mxu0 %v2446
        %2471 = vmatprep.subr.bf16.mxu0 0
        %2472 = vmatpush1.bf16.msra.mxu0 %v2448
        %2473 = vmatprep.subr.bf16.mxu0 0
        %2474 = vmatpush1.bf16.msra.mxu0 %v2450
        %2475 = vmatprep.subr.bf16.mxu0 0
        %2476 = vmatpush1.bf16.msra.mxu0 0
        %2477 = vmatprep.subr.bf16.mxu0 0
        %2478 = vmatpush1.bf16.msra.mxu0 0
        %2479 = vmatprep.subr.bf16.mxu0 0
        %2480 = vmatpush1.bf16.msra.mxu0 0
        %2481 = vmatprep.subr.bf16.mxu0 0
        %2482 = vmatpush1.bf16.msra.mxu0 0
        %2483 = vmatprep.subr.bf16.mxu0 0
        %2484 = vmatpush1.bf16.msra.mxu0 0
        %2485 = vmatprep.subr.bf16.mxu0 0
        %2486 = vmatpush1.bf16.msra.mxu0 0
        %2487 = vmatprep.subr.bf16.mxu0 0
        %2488 = vmatpush1.bf16.msra.mxu0 0
        %2489 = vmatprep.subr.bf16.mxu0 0
        %2490 = vmatpush1.bf16.msra.mxu0 0
        %2491 = vmatprep.mubr.bf16.mxu0 0
        %2492 = vmatmul.mubr.bf16.gmra.mrb[0].mxu0 %v2427
        %v2493 = vpop.f32.mrb[0].mxu0
        %v2494 = vadd.f32 0.0, %v2493
        %v2495 = vpop.f32.mrb[0].mxu0
        %v2496 = vpop.f32.mrb[0].mxu0
        %v2497 = vadd.f32 0.0, %v2496
        %v2498 = vpop.f32.mrb[0].mxu0
        %2499 = vmatprep.mubr.bf16.mxu0 0
        %2500 = vmatmul.mubr.bf16.gmra.mrb[0].mxu0 %v2428
        %v2501 = vpop.f32.mrb[0].mxu0
        %v2502 = vadd.f32 0.0, %v2501
        %v2503 = vpop.f32.mrb[0].mxu0
        %v2504 = vpop.f32.mrb[0].mxu0
        %v2505 = vadd.f32 0.0, %v2504
        %v2506 = vpop.f32.mrb[0].mxu0
        %2507 = vmatprep.mubr.bf16.mxu0 0
        %2508 = vmatmul.mubr.bf16.gmra.mrb[0].mxu0 %v2429
        %v2509 = vpop.f32.mrb[0].mxu0
        %v2510 = vadd.f32 0.0, %v2509
        %v2511 = vpop.f32.mrb[0].mxu0
        %v2512 = vpop.f32.mrb[0].mxu0
        %v2513 = vadd.f32 0.0, %v2512
        %v2514 = vpop.f32.mrb[0].mxu0
        %2515 = vmatprep.mubr.bf16.mxu0 0
        %2516 = vmatmul.mubr.bf16.gmra.mrb[0].mxu0 %v2430
        %v2517 = vpop.f32.mrb[0].mxu0
        %v2518 = vadd.f32 0.0, %v2517
        %v2519 = vpop.f32.mrb[0].mxu0
        %v2520 = vpop.f32.mrb[0].mxu0
        %v2521 = vadd.f32 0.0, %v2520
        %v2522 = vpop.f32.mrb[0].mxu0
        %2523 = vmatprep.mubr.bf16.mxu0 0
        %2524 = vmatmul.mubr.bf16.gmra.mrb[0].mxu0 %v2431
        %v2525 = vpop.f32.mrb[0].mxu0
        %v2526 = vadd.f32 0.0, %v2525
        %v2527 = vpop.f32.mrb[0].mxu0
        %v2528 = vpop.f32.mrb[0].mxu0
        %v2529 = vadd.f32 0.0, %v2528
        %v2530 = vpop.f32.mrb[0].mxu0
        %2531 = vmatprep.mubr.bf16.mxu0 0
        %2532 = vmatmul.mubr.bf16.gmra.mrb[0].mxu0 %v2432
        %v2533 = vpop.f32.mrb[0].mxu0
        %v2534 = vadd.f32 0.0, %v2533
        %v2535 = vpop.f32.mrb[0].mxu0
        %v2536 = vpop.f32.mrb[0].mxu0
        %v2537 = vadd.f32 0.0, %v2536
        %v2538 = vpop.f32.mrb[0].mxu0
        %2539 = vmatprep.mubr.bf16.mxu0 0
        %2540 = vmatmul.mubr.bf16.gmra.mrb[0].mxu0 %v2433
        %v2541 = vpop.f32.mrb[0].mxu0
        %v2542 = vadd.f32 0.0, %v2541
        %v2543 = vpop.f32.mrb[0].mxu0
        %v2544 = vpop.f32.mrb[0].mxu0
        %v2545 = vadd.f32 0.0, %v2544
        %v2546 = vpop.f32.mrb[0].mxu0
        %2547 = vmatprep.mubr.bf16.mxu0 0
        %2548 = vmatmul.mubr.bf16.gmra.mrb[0].mxu0 %v2434
        %v2549 = vpop.f32.mrb[0].mxu0
        %v2550 = vadd.f32 0.0, %v2549
        %v2551 = vpop.f32.mrb[0].mxu0
        %v2552 = vpop.f32.mrb[0].mxu0
        %v2553 = vadd.f32 0.0, %v2552
        %v2554 = vpop.f32.mrb[0].mxu0
        %2555 = vdwg.mxu0
        %v2556 = vrcp.pop %v2396
        %v2557 = vrcp.pop %v2398
        %v2558 = vrcp.pop %v2400
        %v2559 = vrcp.pop %v2402
        %v2560 = vrcp.pop %v2404
        %v2561 = vrcp.pop %v2406
        %v2562 = vrcp.pop %v2408
        %v2563 = vrcp.pop %v2410
        %v2564 = vrcp.pop %v2412
        %v2565 = vrcp.pop %v2414
        %v2566 = vrcp.pop %v2416
        %v2567 = vrcp.pop %v2418
        %v2568 = vrcp.pop %v2420
        %v2569 = vrcp.pop %v2422
        %v2570 = vrcp.pop %v2424
        %v2571 = vrcp.pop %v2426
        %v2572 = vmul.f32 %v2494, %v2556
        %v2573 = vmul.f32 %v2497, %v2557
        %v2574 = vmul.f32 %v2502, %v2558
        %v2575 = vmul.f32 %v2505, %v2559
        %v2576 = vmul.f32 %v2510, %v2560
        %v2577 = vmul.f32 %v2513, %v2561
        %v2578 = vmul.f32 %v2518, %v2562
        %v2579 = vmul.f32 %v2521, %v2563
        %v2580 = vmul.f32 %v2526, %v2564
        %v2581 = vmul.f32 %v2529, %v2565
        %v2582 = vmul.f32 %v2534, %v2566
        %v2583 = vmul.f32 %v2537, %v2567
        %v2584 = vmul.f32 %v2542, %v2568
        %v2585 = vmul.f32 %v2545, %v2569
        %v2586 = vmul.f32 %v2550, %v2570
        %v2587 = vmul.f32 %v2553, %v2571
        %2604 = vrot.lane.b32.xlu0 %v1640, 32
        %v2605 = vpop.permute.xlu0 %2604
        %2606 = vrot.lane.b32.xlu0 %v1641, 32
        %v2607 = vpop.permute.xlu0 %2606
        %2608 = vrot.lane.b32.xlu0 %v1642, 32
        %v2609 = vpop.permute.xlu0 %2608
        %2610 = vrot.lane.b32.xlu0 %v1643, 32
        %v2611 = vpop.permute.xlu0 %2610
        %2612 = vrot.lane.b32.xlu0 %v1644, 32
        %v2613 = vpop.permute.xlu0 %2612
        %2614 = vrot.lane.b32.xlu0 %v1645, 32
        %v2615 = vpop.permute.xlu0 %2614
        %2616 = vrot.lane.b32.xlu0 %v1646, 32
        %v2617 = vpop.permute.xlu0 %2616
        %2618 = vrot.lane.b32.xlu0 %v1647, 32
        %v2619 = vpop.permute.xlu0 %2618
        %2620 = vrot.lane.b32.xlu0 %v1648, 32
        %v2621 = vpop.permute.xlu0 %2620
        %2622 = vrot.lane.b32.xlu0 %v1649, 32
        %v2623 = vpop.permute.xlu0 %2622
        %2624 = vrot.lane.b32.xlu0 %v1650, 32
        %v2625 = vpop.permute.xlu0 %2624
        %2626 = vrot.lane.b32.xlu0 %v1651, 32
        %v2627 = vpop.permute.xlu0 %2626
        %2628 = vrot.lane.b32.xlu0 %v1652, 32
        %v2629 = vpop.permute.xlu0 %2628
        %2630 = vrot.lane.b32.xlu0 %v1653, 32
        %v2631 = vpop.permute.xlu0 %2630
        %2632 = vrot.lane.b32.xlu0 %v1654, 32
        %v2633 = vpop.permute.xlu0 %2632
        %2634 = vrot.lane.b32.xlu0 %v1655, 32
        %v2635 = vpop.permute.xlu0 %2634
        %2668 = vrot.lane.b32.xlu0 %v2106, 64
        %v2669 = vpop.permute.xlu0 %2668
        %2670 = vrot.lane.b32.xlu0 %v2107, 64
        %v2671 = vpop.permute.xlu0 %2670
        %2672 = vrot.lane.b32.xlu0 %v2108, 64
        %v2673 = vpop.permute.xlu0 %2672
        %2674 = vrot.lane.b32.xlu0 %v2109, 64
        %v2675 = vpop.permute.xlu0 %2674
        %2676 = vrot.lane.b32.xlu0 %v2110, 64
        %v2677 = vpop.permute.xlu0 %2676
        %2678 = vrot.lane.b32.xlu0 %v2111, 64
        %v2679 = vpop.permute.xlu0 %2678
        %2680 = vrot.lane.b32.xlu0 %v2112, 64
        %v2681 = vpop.permute.xlu0 %2680
        %2682 = vrot.lane.b32.xlu0 %v2113, 64
        %v2683 = vpop.permute.xlu0 %2682
        %2684 = vrot.lane.b32.xlu0 %v2114, 64
        %v2685 = vpop.permute.xlu0 %2684
        %2686 = vrot.lane.b32.xlu0 %v2115, 64
        %v2687 = vpop.permute.xlu0 %2686
        %2688 = vrot.lane.b32.xlu0 %v2116, 64
        %v2689 = vpop.permute.xlu0 %2688
        %2690 = vrot.lane.b32.xlu0 %v2117, 64
        %v2691 = vpop.permute.xlu0 %2690
        %2692 = vrot.lane.b32.xlu0 %v2118, 64
        %v2693 = vpop.permute.xlu0 %2692
        %2694 = vrot.lane.b32.xlu0 %v2119, 64
        %v2695 = vpop.permute.xlu0 %2694
        %2696 = vrot.lane.b32.xlu0 %v2120, 64
        %v2697 = vpop.permute.xlu0 %2696
        %2698 = vrot.lane.b32.xlu0 %v2121, 64
        %v2699 = vpop.permute.xlu0 %2698
        %2732 = vrot.lane.b32.xlu0 %v2572, 96
        %v2733 = vpop.permute.xlu0 %2732
        %2734 = vrot.lane.b32.xlu0 %v2573, 96
        %v2735 = vpop.permute.xlu0 %2734
        %2736 = vrot.lane.b32.xlu0 %v2574, 96
        %v2737 = vpop.permute.xlu0 %2736
        %2738 = vrot.lane.b32.xlu0 %v2575, 96
        %v2739 = vpop.permute.xlu0 %2738
        %2740 = vrot.lane.b32.xlu0 %v2576, 96
        %v2741 = vpop.permute.xlu0 %2740
        %2742 = vrot.lane.b32.xlu0 %v2577, 96
        %v2743 = vpop.permute.xlu0 %2742
        %2744 = vrot.lane.b32.xlu0 %v2578, 96
        %v2745 = vpop.permute.xlu0 %2744
        %2746 = vrot.lane.b32.xlu0 %v2579, 96
        %v2747 = vpop.permute.xlu0 %2746
        %2748 = vrot.lane.b32.xlu0 %v2580, 96
        %v2749 = vpop.permute.xlu0 %2748
        %2750 = vrot.lane.b32.xlu0 %v2581, 96
        %v2751 = vpop.permute.xlu0 %2750
        %2752 = vrot.lane.b32.xlu0 %v2582, 96
        %v2753 = vpop.permute.xlu0 %2752
        %2754 = vrot.lane.b32.xlu0 %v2583, 96
        %v2755 = vpop.permute.xlu0 %2754
        %2756 = vrot.lane.b32.xlu0 %v2584, 96
        %v2757 = vpop.permute.xlu0 %2756
        %2758 = vrot.lane.b32.xlu0 %v2585, 96
        %v2759 = vpop.permute.xlu0 %2758
        %2760 = vrot.lane.b32.xlu0 %v2586, 96
        %v2761 = vpop.permute.xlu0 %2760
        %2762 = vrot.lane.b32.xlu0 %v2587, 96
        %v2763 = vpop.permute.xlu0 %2762
        %v2780 = vsel %vm755, %v1150, %v2605
        %v2781 = vsel %vm755, %v1151, %v2607
        %v2782 = vsel %vm755, %v1152, %v2609
        %v2783 = vsel %vm755, %v1153, %v2611
        %v2784 = vsel %vm755, %v1154, %v2613
        %v2785 = vsel %vm755, %v1155, %v2615
        %v2786 = vsel %vm755, %v1156, %v2617
        %v2787 = vsel %vm755, %v1157, %v2619
        %v2788 = vsel %vm755, %v1158, %v2621
        %v2789 = vsel %vm755, %v1159, %v2623
        %v2790 = vsel %vm755, %v1160, %v2625
        %v2791 = vsel %vm755, %v1161, %v2627
        %v2792 = vsel %vm755, %v1162, %v2629
        %v2793 = vsel %vm755, %v1163, %v2631
        %v2794 = vsel %vm755, %v1164, %v2633
        %v2795 = vsel %vm755, %v1165, %v2635
        %vm2796 = vcmask 523264
        %v2797 = vsel %vm2796, %v2780, %v2669
        %v2798 = vsel %vm2796, %v2781, %v2671
        %v2799 = vsel %vm2796, %v2782, %v2673
        %v2800 = vsel %vm2796, %v2783, %v2675
        %v2801 = vsel %vm2796, %v2784, %v2677
        %v2802 = vsel %vm2796, %v2785, %v2679
        %v2803 = vsel %vm2796, %v2786, %v2681
        %v2804 = vsel %vm2796, %v2787, %v2683
        %v2805 = vsel %vm2796, %v2788, %v2685
        %v2806 = vsel %vm2796, %v2789, %v2687
        %v2807 = vsel %vm2796, %v2790, %v2689
        %v2808 = vsel %vm2796, %v2791, %v2691
        %v2809 = vsel %vm2796, %v2792, %v2693
        %v2810 = vsel %vm2796, %v2793, %v2695
        %v2811 = vsel %vm2796, %v2794, %v2697
        %v2812 = vsel %vm2796, %v2795, %v2699
        %vm2813 = vcmask 785408
        %v2814 = vsel %vm2813, %v2797, %v2733
        %v2815 = vsel %vm2813, %v2798, %v2735
        %v2816 = vsel %vm2813, %v2799, %v2737
        %v2817 = vsel %vm2813, %v2800, %v2739
        %v2818 = vsel %vm2813, %v2801, %v2741
        %v2819 = vsel %vm2813, %v2802, %v2743
        %v2820 = vsel %vm2813, %v2803, %v2745
        %v2821 = vsel %vm2813, %v2804, %v2747
        %v2822 = vsel %vm2813, %v2805, %v2749
        %v2823 = vsel %vm2813, %v2806, %v2751
        %v2824 = vsel %vm2813, %v2807, %v2753
        %v2825 = vsel %vm2813, %v2808, %v2755
        %v2826 = vsel %vm2813, %v2809, %v2757
        %v2827 = vsel %vm2813, %v2810, %v2759
        %v2828 = vsel %vm2813, %v2811, %v2761
        %v2829 = vsel %vm2813, %v2812, %v2763
        %v2830 = vpack.c.bf16 %v2815, %v2814
        %v2831 = vpack.c.bf16 %v2817, %v2816
        %v2832 = vpack.c.bf16 %v2819, %v2818
        %v2833 = vpack.c.bf16 %v2821, %v2820
        %v2834 = vpack.c.bf16 %v2823, %v2822
        %v2835 = vpack.c.bf16 %v2825, %v2824
        %v2836 = vpack.c.bf16 %v2827, %v2826
        %v2837 = vpack.c.bf16 %v2829, %v2828
        %v2838 = vld [vmem:[#allocation7] sm:$0xf]
        %v2839 = vld [vmem:[#allocation7 + $0x4] sm:$0xf]
        %v2840 = vld [vmem:[#allocation7 + $0x8] sm:$0xf]
        %v2841 = vld [vmem:[#allocation7 + $0xc] sm:$0xf]
        %v2842 = vld [vmem:[#allocation7 + $0x10] sm:$0xf]
        %v2843 = vld [vmem:[#allocation7 + $0x14] sm:$0xf]
        %v2844 = vld [vmem:[#allocation7 + $0x18] sm:$0xf]
        %v2845 = vld [vmem:[#allocation7 + $0x1c] sm:$0xf]
        %v2846 = vld [vmem:[#allocation7 + $0x20] sm:$0xf]
        %v2847 = vld [vmem:[#allocation7 + $0x24] sm:$0xf]
        %v2848 = vld [vmem:[#allocation7 + $0x28] sm:$0xf]
        %v2849 = vld [vmem:[#allocation7 + $0x2c] sm:$0xf]
        %v2850 = vld [vmem:[#allocation7 + $0x30] sm:$0xf]
        %v2851 = vld [vmem:[#allocation7 + $0x34] sm:$0xf]
        %v2852 = vld [vmem:[#allocation7 + $0x38] sm:$0xf]
        %v2853 = vld [vmem:[#allocation7 + $0x3c] sm:$0xf]
        %v2854 = vld [vmem:[%s3] sm:$0x1]
        %v2856 = vlaneseq
        %v2857 = vshrl.u32 %v2856, 7
        %v2858 = vsub.s32 0, %v2857
        %v2859 = vrot.slane %v2854, %v2858
        %v2877 = vunpack.c.l.b16 %v2838
        %v2878 = vunpack.c.l.b16 %v2839
        %v2879 = vunpack.c.l.b16 %v2840
        %v2880 = vunpack.c.l.b16 %v2841
        %v2881 = vunpack.c.l.b16 %v2842
        %v2882 = vunpack.c.l.b16 %v2843
        %v2883 = vunpack.c.l.b16 %v2844
        %v2884 = vunpack.c.l.b16 %v2845
        %v2885 = vunpack.c.l.b16 %v2846
        %v2886 = vunpack.c.l.b16 %v2847
        %v2887 = vunpack.c.l.b16 %v2848
        %v2888 = vunpack.c.l.b16 %v2849
        %v2889 = vunpack.c.l.b16 %v2850
        %v2890 = vunpack.c.l.b16 %v2851
        %v2891 = vunpack.c.l.b16 %v2852
        %v2892 = vunpack.c.l.b16 %v2853
        %v2893 = vpack.c.b16 %v2878, %v2877
        %v2894 = vpack.c.b16 %v2880, %v2879
        %v2895 = vpack.c.b16 %v2882, %v2881
        %v2896 = vpack.c.b16 %v2884, %v2883
        %v2897 = vpack.c.b16 %v2886, %v2885
        %v2898 = vpack.c.b16 %v2888, %v2887
        %v2899 = vpack.c.b16 %v2890, %v2889
        %v2900 = vpack.c.b16 %v2892, %v2891
        %2909 = vmatprep.subr.bf16.mxu0 0
        %2910 = vmatpush1.bf16.msra.mxu0 %v2893
        %2911 = vmatprep.subr.bf16.mxu0 0
        %2912 = vmatpush1.bf16.msra.mxu0 %v2894
        %2913 = vmatprep.subr.bf16.mxu0 0
        %2914 = vmatpush1.bf16.msra.mxu0 %v2895
        %2915 = vmatprep.subr.bf16.mxu0 0
        %2916 = vmatpush1.bf16.msra.mxu0 %v2896
        %2917 = vmatprep.subr.bf16.mxu0 0
        %2918 = vmatpush1.bf16.msra.mxu0 %v2897
        %2919 = vmatprep.subr.bf16.mxu0 0
        %2920 = vmatpush1.bf16.msra.mxu0 %v2898
        %2921 = vmatprep.subr.bf16.mxu0 0
        %2922 = vmatpush1.bf16.msra.mxu0 %v2899
        %2923 = vmatprep.subr.bf16.mxu0 0
        %2924 = vmatpush1.bf16.msra.mxu0 %v2900
        %2925 = vmatprep.subr.bf16.mxu0 0
        %2926 = vmatpush1.bf16.msra.mxu0 0
        %2927 = vmatprep.subr.bf16.mxu0 0
        %2928 = vmatpush1.bf16.msra.mxu0 0
        %2929 = vmatprep.subr.bf16.mxu0 0
        %2930 = vmatpush1.bf16.msra.mxu0 0
        %2931 = vmatprep.subr.bf16.mxu0 0
        %2932 = vmatpush1.bf16.msra.mxu0 0
        %2933 = vmatprep.subr.bf16.mxu0 0
        %2934 = vmatpush1.bf16.msra.mxu0 0
        %2935 = vmatprep.subr.bf16.mxu0 0
        %2936 = vmatpush1.bf16.msra.mxu0 0
        %2937 = vmatprep.subr.bf16.mxu0 0
        %2938 = vmatpush1.bf16.msra.mxu0 0
        %2939 = vmatprep.subr.bf16.mxu0 0
        %2940 = vmatpush1.bf16.msra.mxu0 0
        %2941 = vmatprep.mubr.bf16.mxu0 0
        %2942 = vmatmul.mubr.bf16.gmra.mrb[0].mxu0 %v2830
        %v2943 = vpop.f32.mrb[0].mxu0
        %v2944 = vadd.f32 %v2859, %v2943
        %v2945 = vpop.f32.mrb[0].mxu0
        %v2946 = vpop.f32.mrb[0].mxu0
        %v2947 = vadd.f32 %v2859, %v2946
        %v2948 = vpop.f32.mrb[0].mxu0
        %2949 = vmatprep.mubr.bf16.mxu0 0
        %2950 = vmatmul.mubr.bf16.gmra.mrb[0].mxu0 %v2831
        %v2951 = vpop.f32.mrb[0].mxu0
        %v2952 = vadd.f32 %v2859, %v2951
        %v2953 = vpop.f32.mrb[0].mxu0
        %v2954 = vpop.f32.mrb[0].mxu0
        %v2955 = vadd.f32 %v2859, %v2954
        %v2956 = vpop.f32.mrb[0].mxu0
        %2957 = vmatprep.mubr.bf16.mxu0 0
        %2958 = vmatmul.mubr.bf16.gmra.mrb[0].mxu0 %v2832
        %v2959 = vpop.f32.mrb[0].mxu0
        %v2960 = vadd.f32 %v2859, %v2959
        %v2961 = vpop.f32.mrb[0].mxu0
        %v2962 = vpop.f32.mrb[0].mxu0
        %v2963 = vadd.f32 %v2859, %v2962
        %v2964 = vpop.f32.mrb[0].mxu0
        %2965 = vmatprep.mubr.bf16.mxu0 0
        %2966 = vmatmul.mubr.bf16.gmra.mrb[0].mxu0 %v2833
        %v2967 = vpop.f32.mrb[0].mxu0
        %v2968 = vadd.f32 %v2859, %v2967
        %v2969 = vpop.f32.mrb[0].mxu0
        %v2970 = vpop.f32.mrb[0].mxu0
        %v2971 = vadd.f32 %v2859, %v2970
        %v2972 = vpop.f32.mrb[0].mxu0
        %2973 = vmatprep.mubr.bf16.mxu0 0
        %2974 = vmatmul.mubr.bf16.gmra.mrb[0].mxu0 %v2834
        %v2975 = vpop.f32.mrb[0].mxu0
        %v2976 = vadd.f32 %v2859, %v2975
        %v2977 = vpop.f32.mrb[0].mxu0
        %v2978 = vpop.f32.mrb[0].mxu0
        %v2979 = vadd.f32 %v2859, %v2978
        %v2980 = vpop.f32.mrb[0].mxu0
        %2981 = vmatprep.mubr.bf16.mxu0 0
        %2982 = vmatmul.mubr.bf16.gmra.mrb[0].mxu0 %v2835
        %v2983 = vpop.f32.mrb[0].mxu0
        %v2984 = vadd.f32 %v2859, %v2983
        %v2985 = vpop.f32.mrb[0].mxu0
        %v2986 = vpop.f32.mrb[0].mxu0
        %v2987 = vadd.f32 %v2859, %v2986
        %v2988 = vpop.f32.mrb[0].mxu0
        %2989 = vmatprep.mubr.bf16.mxu0 0
        %2990 = vmatmul.mubr.bf16.gmra.mrb[0].mxu0 %v2836
        %v2991 = vpop.f32.mrb[0].mxu0
        %v2992 = vadd.f32 %v2859, %v2991
        %v2993 = vpop.f32.mrb[0].mxu0
        %v2994 = vpop.f32.mrb[0].mxu0
        %v2995 = vadd.f32 %v2859, %v2994
        %v2996 = vpop.f32.mrb[0].mxu0
        %2997 = vmatprep.mubr.bf16.mxu0 0
        %2998 = vmatmul.mubr.bf16.gmra.mrb[0].mxu0 %v2837
        %v2999 = vpop.f32.mrb[0].mxu0
        %v3000 = vadd.f32 %v2859, %v2999
        %v3001 = vpop.f32.mrb[0].mxu0
        %v3002 = vpop.f32.mrb[0].mxu0
        %v3003 = vadd.f32 %v2859, %v3002
        %v3004 = vpop.f32.mrb[0].mxu0
        %3005 = vdwg.mxu0
        %3006 = vst [vmem:[%s244] sm:$0xff] %v2944
        %3007 = vst [vmem:[%s244 + $0x8] sm:$0xff] %v2947
        %3008 = vst [vmem:[%s244 + $0x10] sm:$0xff] %v2952
        %3009 = vst [vmem:[%s244 + $0x18] sm:$0xff] %v2955
        %3010 = vst [vmem:[%s244 + $0x20] sm:$0xff] %v2960
        %3011 = vst [vmem:[%s244 + $0x28] sm:$0xff] %v2963
        %3012 = vst [vmem:[%s244 + $0x30] sm:$0xff] %v2968
        %3013 = vst [vmem:[%s244 + $0x38] sm:$0xff] %v2971
        %3014 = vst [vmem:[%s244 + $0x40] sm:$0xff] %v2976
        %3015 = vst [vmem:[%s244 + $0x48] sm:$0xff] %v2979
        %3016 = vst [vmem:[%s244 + $0x50] sm:$0xff] %v2984
        %3017 = vst [vmem:[%s244 + $0x58] sm:$0xff] %v2987
        %3018 = vst [vmem:[%s244 + $0x60] sm:$0xff] %v2992
        %3019 = vst [vmem:[%s244 + $0x68] sm:$0xff] %v2995
        %3020 = vst [vmem:[%s244 + $0x70] sm:$0xff] %v3000
        %3021 = vst [vmem:[%s244 + $0x78] sm:$0xff] %v3003
        %s3022 = sand.u32 %s119, 1
        %s3023 = scalar_lea.sflag [#allocation4], %s3022
        %s3024 = sand.u32 %s119, 1
        %s3025 = smul.addr %s3024, 128
        %s3026 = scalar_lea.vmem [#allocation8], %s3025
        // Predicated region
        $region49: #{tpu_custom_call.1} parent=35 // pred_check
          %p3027 = pneg %p129
        $region50: #{tpu_custom_call.1} parent=35 // pred_check_branch
          %3029 = sbr.rel (%p3027) target = $region52
        $region51: #{tpu_custom_call.1} parent=35 // pred_region
          %s3031 = ssub.s32 2048, 2048
          %3032 = vsyncadd %s3023, %s3031
          %s3033 = smul.addr %s22, 16
          %s3034 = smul.addr %s3033, 128
          %s3035 = scalar_lea.hbm %s4, %s3034
          %s3036 = sshll.u32 %s3026, 4
          %s3037 = int_to_ptr.vmem [resolvable:$true] %s3036
          %3042 = dma.vmem_to_hbm [thread:$0]  %s3037, 2048, %s3035, %s3023, 128, 128, 8
        $region52: #{tpu_custom_call.1} parent=35 // pred_fallthru
          _
      $region36: #{tpu_custom_call.1} parent=5 // pred_fallthru
        _
      %p3043 = scmp.le.s32.totalorder 2, %s17
      // Predicated region
      $region53: #{tpu_custom_call.1} parent=5 // pred_check
        %p3044 = pneg %p3043
      $region54: #{tpu_custom_call.1} parent=5 // pred_check_branch
        %3046 = sbr.rel (%p3044) target = $region56
      $region55: #{tpu_custom_call.1} parent=5 // pred_region
        %s3047 = ssub.s32 %s17, 2
        // Predicated region
        $region57: #{tpu_custom_call.1} parent=55 // pred_check
          %p3048 = pneg %p135
        $region58: #{tpu_custom_call.1} parent=55 // pred_check_branch
          %3050 = sbr.rel (%p3048) target = $region60
        $region59: #{tpu_custom_call.1} parent=55 // pred_region
          %s3051 = sand.u32 %s120, 1
          %s3052 = scalar_lea.sflag [#allocation4], %s3051
          %s3053 = sand.u32 %s120, 1
          %s3054 = smul.addr %s3053, 128
          %s3055 = scalar_lea.vmem [#allocation8], %s3054
          %3056 = dma.done %s3052, 2048
        $region60: #{tpu_custom_call.1} parent=55 // pred_fallthru
          _
      $region56: #{tpu_custom_call.1} parent=5 // pred_fallthru
        _
    $region6: #{tpu_custom_call.1} parent=1 // loop_footer
      %s21 = sadd.s32 1, %s17
    $region7: #{tpu_custom_call.1} parent=1 // loop_footer_branch
      %16 = sbr.rel target = $region3
    $region8: #{tpu_custom_call.1} parent=1 // loop_exit
      _
    %3057 = vsyncpa [#allocation3], 1
    %s3058 = scalar_lea.sflag [#allocation3], 1
    %3059 = vsyncpa %s3058, 1
    %3060 = vsyncpa [#allocation6], 1
    %3061 = vsyncpa [#allocation4], 1
    %s3062 = scalar_lea.sflag [#allocation4], 1
    %3063 = vsyncpa %s3062, 1

</llo_original>
